<compile_context>
chip_gen: v6e
topology: v6e:2x2x1
jax: 0.10.0
libtpu: 0.0.40
codegen_flags: <defaults>
</compile_context>

<pallas_src>
import jax
import jax.numpy as jnp
from jax.experimental import pallas as pl
from jax.experimental.pallas import tpu as pltpu

LANE = 128
_HIGHEST = jax.lax.Precision.HIGHEST


def _round_up(n, m):
    return ((n + m - 1) // m) * m


def _mlp_kernel(x_ref, w1t_ref, w2t_ref, w3t_ref, w4c_ref, b_ref, o_ref):
    # x_ref: (3, TILE_B) -- batch lives in the lane dimension.
    # w1t_ref: (32, 3), w2t_ref/w3t_ref: (32, 32), w4c_ref: (32, 1), b_ref: (32, 4).
    x = x_ref[...]
    w1t = w1t_ref[...]

    # fc1: contraction dim K=3 -> 3 broadcast FMAs on the VPU (skip the MXU).
    h = (w1t[:, 0:1] * x[0:1, :]
         + w1t[:, 1:2] * x[1:2, :]
         + w1t[:, 2:3] * x[2:3, :]
         + b_ref[:, 0:1])
    h = jnp.tanh(h)                                   # (32, TILE_B), lane-dense

    # fc2 / fc3: 32x32 matmuls on the MXU, f32 accumulation.
    h = jnp.tanh(
        jnp.dot(w2t_ref[...], h,
                preferred_element_type=jnp.float32, precision=_HIGHEST)
        + b_ref[:, 1:2])
    h = jnp.tanh(
        jnp.dot(w3t_ref[...], h,
                preferred_element_type=jnp.float32, precision=_HIGHEST)
        + b_ref[:, 2:3])

    # fc4: single output unit -> weighted sublane reduce (VPU + XLU), not MXU.
    y = jnp.sum(w4c_ref[...] * h, axis=0, keepdims=True) + b_ref[0:1, 3:4]

    o_ref[...] = y.astype(o_ref.dtype)                # (1, TILE_B), lane-dense store


def sensitivity_nn_forward(x, params, tile_b=2048):
    """x: (B, 3) float32 -> (B, 1) float32."""
    w1, b1, w2, b2, w3, b3, w4, b4 = params
    B = x.shape[0]

    # Pick a lane-aligned batch tile and pad the batch to a multiple of it.
    tile = min(_round_up(tile_b, LANE), _round_up(max(B, 1), LANE))
    bp = _round_up(max(B, 1), tile)

    # Layout plumbing (done once in the wrapper, outside the kernel):
    xT = x.T                                          # (3, B), batch in lanes
    if bp != B:
        xT = jnp.pad(xT, ((0, 0), (0, bp - B)))

    w1t = w1.T                                        # (32, 3)
    w2t = w2.T                                        # (32, 32)
    w3t = w3.T                                        # (32, 32)
    w4c = w4                                          # (32, 1)
    bias_pack = jnp.zeros((32, 4), jnp.float32)
    bias_pack = bias_pack.at[:, 0].set(b1[0])
    bias_pack = bias_pack.at[:, 1].set(b2[0])
    bias_pack = bias_pack.at[:, 2].set(b3[0])
    bias_pack = bias_pack.at[0, 3].set(b4[0, 0])

    grid = (bp // tile,)
    out = pl.pallas_call(
        _mlp_kernel,
        out_shape=jax.ShapeDtypeStruct((1, bp), jnp.float32),
        grid=grid,
        in_specs=[
            pl.BlockSpec((3, tile), lambda i: (0, i)),     # streamed x tile
            pl.BlockSpec((32, 3), lambda i: (0, 0)),       # resident weights
            pl.BlockSpec((32, 32), lambda i: (0, 0)),
            pl.BlockSpec((32, 32), lambda i: (0, 0)),
            pl.BlockSpec((32, 1), lambda i: (0, 0)),
            pl.BlockSpec((32, 4), lambda i: (0, 0)),       # packed biases
        ],
        out_specs=pl.BlockSpec((1, tile), lambda i: (0, i)),
        compiler_params=pltpu.CompilerParams(
            dimension_semantics=("parallel",),             # megacore on v7x
            vmem_limit_bytes=32 * 1024 * 1024,
        ),
    )(xT, w1t, w2t, w3t, w4c, bias_pack)

    return out[0, :B].reshape(B, 1)


def init_params(key):
    """Deterministic init mirroring PyTorch Linear shapes.
    fc1: 3->32, fc2: 32->32, fc3: 32->32, fc4: 32->1.
    Stored as (in, out) weights and (1, out) biases."""
    ks = jax.random.split(key, 8)

    def linear(kw, kb, fan_in, fan_out):
        bound = 1.0 / jnp.sqrt(fan_in)
        w = jax.random.uniform(kw, (fan_in, fan_out), jnp.float32, -bound, bound)
        b = jax.random.uniform(kb, (1, fan_out), jnp.float32, -bound, bound)
        return w, b

    w1, b1 = linear(ks[0], ks[1], 3, 32)
    w2, b2 = linear(ks[2], ks[3], 32, 32)
    w3, b3 = linear(ks[4], ks[5], 32, 32)
    w4, b4 = linear(ks[6], ks[7], 32, 1)
    return (w1, b1, w2, b2, w3, b3, w4, b4)


def reference_forward(x, params):
    w1, b1, w2, b2, w3, b3, w4, b4 = params
    h = jnp.tanh(jnp.dot(x, w1, precision=_HIGHEST) + b1)
    h = jnp.tanh(jnp.dot(h, w2, precision=_HIGHEST) + b2)
    h = jnp.tanh(jnp.dot(h, w3, precision=_HIGHEST) + b3)
    return jnp.dot(h, w4, precision=_HIGHEST) + b4


if __name__ == "__main__":
    key = jax.random.PRNGKey(0)
    k_x, k_p, k_x2 = jax.random.split(key, 3)
    params = init_params(k_p)

    # Small single-tile case.
    B = 8
    x = jax.random.normal(k_x, (B, 3), dtype=jnp.float32)
    out = jax.block_until_ready(sensitivity_nn_forward(x, params))
    ref = reference_forward(x, params)
    assert out.shape == (B, 1)
    assert jnp.allclose(out, ref, atol=1e-5, rtol=1e-5)

    # Multi-tile case (exercises the batch grid + padding + resident weights).
    B2 = 300
    x2 = jax.random.normal(k_x2, (B2, 3), dtype=jnp.float32)
    out2 = jax.block_until_ready(sensitivity_nn_forward(x2, params, tile_b=128))
    ref2 = reference_forward(x2, params)
    assert out2.shape == (B2, 1)
    assert jnp.allclose(out2, ref2, atol=1e-5, rtol=1e-5)

    print("KERNEL_OK")
</pallas_src>

<mosaic_0001>
module attributes {stable_mosaic.version = 11 : i64} {
  func.func @_mlp_kernel(%arg0: i32, %arg1: memref<3x128xf32, #tpu.memory_space<vmem>>, %arg2: memref<32x3xf32, #tpu.memory_space<vmem>>, %arg3: memref<32x32xf32, #tpu.memory_space<vmem>>, %arg4: memref<32x32xf32, #tpu.memory_space<vmem>>, %arg5: memref<32x1xf32, #tpu.memory_space<vmem>>, %arg6: memref<32x4xf32, #tpu.memory_space<vmem>>, %arg7: memref<1x128xf32, #tpu.memory_space<vmem>>) attributes {dimension_semantics = [#tpu.dimension_semantics<parallel>], iteration_bounds = array<i64: 1>, scalar_prefetch = 0 : i64, scratch_operands = 0 : i64, tpu.core_type = #tpu.core_type<tc>, window_params = [{transform_indices = @transform_0, window_bounds = array<i64: 3, 128>}, {pipeline_mode = #tpu.pipeline_mode<synchronous>, transform_indices = @transform_1, window_bounds = array<i64: 32, 3>}, {pipeline_mode = #tpu.pipeline_mode<synchronous>, transform_indices = @transform_2, window_bounds = array<i64: 32, 32>}, {pipeline_mode = #tpu.pipeline_mode<synchronous>, transform_indices = @transform_3, window_bounds = array<i64: 32, 32>}, {pipeline_mode = #tpu.pipeline_mode<synchronous>, transform_indices = @transform_4, window_bounds = array<i64: 32, 1>}, {pipeline_mode = #tpu.pipeline_mode<synchronous>, transform_indices = @transform_5, window_bounds = array<i64: 32, 4>}, {transform_indices = @transform_6, window_bounds = array<i64: 1, 128>}]} {
    %c0 = arith.constant 0 : index
    %c0_0 = arith.constant 0 : index
    %0 = vector.load %arg1[%c0, %c0_0] : memref<3x128xf32, #tpu.memory_space<vmem>>, vector<3x128xf32>
    %c0_1 = arith.constant 0 : index
    %c0_2 = arith.constant 0 : index
    %1 = vector.load %arg2[%c0_1, %c0_2] : memref<32x3xf32, #tpu.memory_space<vmem>>, vector<32x3xf32>
    %2 = vector.extract_strided_slice %1 {offsets = [0, 0], sizes = [32, 1], strides = [1, 1]} : vector<32x3xf32> to vector<32x1xf32>
    %3 = vector.extract_strided_slice %0 {offsets = [0, 0], sizes = [1, 128], strides = [1, 1]} : vector<3x128xf32> to vector<1x128xf32>
    %4 = vector.broadcast %2 : vector<32x1xf32> to vector<32x128xf32>
    %5 = vector.broadcast %3 : vector<1x128xf32> to vector<32x128xf32>
    %6 = arith.mulf %4, %5 : vector<32x128xf32>
    %7 = vector.extract_strided_slice %1 {offsets = [0, 1], sizes = [32, 1], strides = [1, 1]} : vector<32x3xf32> to vector<32x1xf32>
    %8 = vector.extract_strided_slice %0 {offsets = [1, 0], sizes = [1, 128], strides = [1, 1]} : vector<3x128xf32> to vector<1x128xf32>
    %9 = vector.broadcast %7 : vector<32x1xf32> to vector<32x128xf32>
    %10 = vector.broadcast %8 : vector<1x128xf32> to vector<32x128xf32>
    %11 = arith.mulf %9, %10 : vector<32x128xf32>
    %12 = arith.addf %6, %11 : vector<32x128xf32>
    %13 = vector.extract_strided_slice %1 {offsets = [0, 2], sizes = [32, 1], strides = [1, 1]} : vector<32x3xf32> to vector<32x1xf32>
    %14 = vector.extract_strided_slice %0 {offsets = [2, 0], sizes = [1, 128], strides = [1, 1]} : vector<3x128xf32> to vector<1x128xf32>
    %15 = vector.broadcast %13 : vector<32x1xf32> to vector<32x128xf32>
    %16 = vector.broadcast %14 : vector<1x128xf32> to vector<32x128xf32>
    %17 = arith.mulf %15, %16 : vector<32x128xf32>
    %18 = arith.addf %12, %17 : vector<32x128xf32>
    %c0_3 = arith.constant 0 : index
    %c0_4 = arith.constant 0 : index
    %19 = vector.load %arg6[%c0_3, %c0_4] : memref<32x4xf32, #tpu.memory_space<vmem>>, vector<32x1xf32>
    %20 = vector.broadcast %19 : vector<32x1xf32> to vector<32x128xf32>
    %21 = arith.addf %18, %20 : vector<32x128xf32>
    %22 = math.tanh %21 : vector<32x128xf32>
    %c0_5 = arith.constant 0 : index
    %c0_6 = arith.constant 0 : index
    %23 = vector.load %arg3[%c0_5, %c0_6] : memref<32x32xf32, #tpu.memory_space<vmem>>, vector<32x32xf32>
    %cst = arith.constant dense<0.000000e+00> : vector<32x128xf32>
    %24 = tpu.matmul %23, %22, %cst {dimension_numbers = #tpu.dot_dimension_numbers<[1], [0], [0], [1], [0, 0, 1, 1], [], []>, precision = #tpu.contract_precision<fp32>} : vector<32x32xf32>, vector<32x128xf32>, vector<32x128xf32> -> vector<32x128xf32>
    %c0_7 = arith.constant 0 : index
    %c1 = arith.constant 1 : index
    %25 = vector.load %arg6[%c0_7, %c1] : memref<32x4xf32, #tpu.memory_space<vmem>>, vector<32x1xf32>
    %26 = vector.broadcast %25 : vector<32x1xf32> to vector<32x128xf32>
    %27 = arith.addf %24, %26 : vector<32x128xf32>
    %28 = math.tanh %27 : vector<32x128xf32>
    %c0_8 = arith.constant 0 : index
    %c0_9 = arith.constant 0 : index
    %29 = vector.load %arg4[%c0_8, %c0_9] : memref<32x32xf32, #tpu.memory_space<vmem>>, vector<32x32xf32>
    %cst_10 = arith.constant dense<0.000000e+00> : vector<32x128xf32>
    %30 = tpu.matmul %29, %28, %cst_10 {dimension_numbers = #tpu.dot_dimension_numbers<[1], [0], [0], [1], [0, 0, 1, 1], [], []>, precision = #tpu.contract_precision<fp32>} : vector<32x32xf32>, vector<32x128xf32>, vector<32x128xf32> -> vector<32x128xf32>
    %c0_11 = arith.constant 0 : index
    %c2 = arith.constant 2 : index
    %31 = vector.load %arg6[%c0_11, %c2] : memref<32x4xf32, #tpu.memory_space<vmem>>, vector<32x1xf32>
    %32 = vector.broadcast %31 : vector<32x1xf32> to vector<32x128xf32>
    %33 = arith.addf %30, %32 : vector<32x128xf32>
    %34 = math.tanh %33 : vector<32x128xf32>
    %c0_12 = arith.constant 0 : index
    %c0_13 = arith.constant 0 : index
    %35 = vector.load %arg5[%c0_12, %c0_13] : memref<32x1xf32, #tpu.memory_space<vmem>>, vector<32x1xf32>
    %36 = vector.broadcast %35 : vector<32x1xf32> to vector<32x128xf32>
    %37 = arith.mulf %36, %34 : vector<32x128xf32>
    %cst_14 = arith.constant dense<0.000000e+00> : vector<128xf32>
    %38 = vector.multi_reduction <add>, %37, %cst_14 [0] : vector<32x128xf32> to vector<128xf32>
    %39 = vector.shape_cast %38 : vector<128xf32> to vector<1x128xf32>
    %c0_15 = arith.constant 0 : index
    %c3 = arith.constant 3 : index
    %40 = vector.load %arg6[%c0_15, %c3] : memref<32x4xf32, #tpu.memory_space<vmem>>, vector<1x1xf32>
    %41 = vector.broadcast %40 : vector<1x1xf32> to vector<1x128xf32>
    %42 = arith.addf %39, %41 : vector<1x128xf32>
    %c0_16 = arith.constant 0 : index
    %c0_17 = arith.constant 0 : index
    %43 = vector.load %arg7[%c0_16, %c0_17] : memref<1x128xf32, #tpu.memory_space<vmem>>, vector<1x128xf32>
    tpu.vector_store %arg7[%c0_16, %c0_17], %42 {strides = array<i32>} : memref<1x128xf32, #tpu.memory_space<vmem>>, vector<1x128xf32>,
    return
  }
  func.func @transform_0(%arg0: i32) -> (i32, i32) {
    %c0_i32 = arith.constant 0 : i32
    %c0_i32_0 = arith.constant 0 : i32
    return %c0_i32, %arg0 : i32, i32
  }
  func.func @transform_1(%arg0: i32) -> (i32, i32) {
    %c0_i32 = arith.constant 0 : i32
    %c0_i32_0 = arith.constant 0 : i32
    %c0_i32_1 = arith.constant 0 : i32
    return %c0_i32, %c0_i32_0 : i32, i32
  }
  func.func @transform_2(%arg0: i32) -> (i32, i32) {
    %c0_i32 = arith.constant 0 : i32
    %c0_i32_0 = arith.constant 0 : i32
    %c0_i32_1 = arith.constant 0 : i32
    return %c0_i32, %c0_i32_0 : i32, i32
  }
  func.func @transform_3(%arg0: i32) -> (i32, i32) {
    %c0_i32 = arith.constant 0 : i32
    %c0_i32_0 = arith.constant 0 : i32
    %c0_i32_1 = arith.constant 0 : i32
    return %c0_i32, %c0_i32_0 : i32, i32
  }
  func.func @transform_4(%arg0: i32) -> (i32, i32) {
    %c0_i32 = arith.constant 0 : i32
    %c0_i32_0 = arith.constant 0 : i32
    %c0_i32_1 = arith.constant 0 : i32
    return %c0_i32, %c0_i32_0 : i32, i32
  }
  func.func @transform_5(%arg0: i32) -> (i32, i32) {
    %c0_i32 = arith.constant 0 : i32
    %c0_i32_0 = arith.constant 0 : i32
    %c0_i32_1 = arith.constant 0 : i32
    return %c0_i32, %c0_i32_0 : i32, i32
  }
  func.func @transform_6(%arg0: i32) -> (i32, i32) {
    %c0_i32 = arith.constant 0 : i32
    %c0_i32_0 = arith.constant 0 : i32
    return %c0_i32, %arg0 : i32, i32
  }
}

</mosaic_0001>

<llo_original>
// kernel: tpu_custom_call.1
$region0: #{tpu_custom_call.1}
  #allocation0 [shape = 'u32[]', space=smem, size = 0x4, offset = 0x4, fixed_abs, tag = 'smem constant byte address 0x4 - core index']
  #allocation1 [shape = 'u32[144,128]{1,0:T(1,128)}', space=vmem, size = 0x12000, scoped, tag = 'internal scratch']
  %s0 = inlined_call_operand.vmem [shape: f32[3,128], index: 0, kind: input, shape index: {}]
  %s1 = inlined_call_operand.vmem [shape: f32[32,3], index: 1, kind: input, shape index: {}]
  %s2 = inlined_call_operand.vmem [shape: f32[32,32], index: 2, kind: input, shape index: {}]
  %s3 = inlined_call_operand.vmem [shape: f32[32,32], index: 3, kind: input, shape index: {}]
  %s4 = inlined_call_operand.vmem [shape: f32[32,1], index: 4, kind: input, shape index: {}]
  %s5 = inlined_call_operand.vmem [shape: f32[32,4], index: 5, kind: input, shape index: {}]
  %s6 = inlined_call_operand.hbm [shape: f32[1,128], index: 6, kind: output, shape index: {}]
  %s7 = sld [smem:[#allocation0]]
  $region34: #{tpu_custom_call.1} parent=0
    _
  %s9 = ssub.s32 1, %s7
  %s10 = scalar_select 0, %s9, %s7
  $region1: #{tpu_custom_call.1} parent=0
    #allocation2 [shape = 'u8[512]{0}', space=vmem, size = 0x400, scoped, tag = 'output window, operand 0, single buffered']
    #allocation3 [shape = 's32[1]{0}', space=sflag, size = 0x4, scoped, tag = 'scoped memory for tpu_custom_call.1']
    %11 = vsyncpa [#allocation3], 0
    // Predicated region
    $region2: #{tpu_custom_call.1} parent=1 // pred_check
      _
    $region3: #{tpu_custom_call.1} parent=1 // pred_check_branch
      %13 = sbr.rel (0) target = $region5
    $region4: #{tpu_custom_call.1} parent=1 // pred_region
      _
    $region5: #{tpu_custom_call.1} parent=1 // pred_fallthru
      _
    // Predicated region
    $region6: #{tpu_custom_call.1} parent=1 // pred_check
      _
    $region7: #{tpu_custom_call.1} parent=1 // pred_check_branch
      %15 = sbr.rel (0) target = $region9
    $region8: #{tpu_custom_call.1} parent=1 // pred_region
      _
    $region9: #{tpu_custom_call.1} parent=1 // pred_fallthru
      _
    // Predicated region
    $region10: #{tpu_custom_call.1} parent=1 // pred_check
      _
    $region11: #{tpu_custom_call.1} parent=1 // pred_check_branch
      %17 = sbr.rel (0) target = $region13
    $region12: #{tpu_custom_call.1} parent=1 // pred_region
      _
    $region13: #{tpu_custom_call.1} parent=1 // pred_fallthru
      _
    // Predicated region
    $region14: #{tpu_custom_call.1} parent=1 // pred_check
      _
    $region15: #{tpu_custom_call.1} parent=1 // pred_check_branch
      %19 = sbr.rel (0) target = $region17
    $region16: #{tpu_custom_call.1} parent=1 // pred_region
      _
    $region17: #{tpu_custom_call.1} parent=1 // pred_fallthru
      _
    // Predicated region
    $region18: #{tpu_custom_call.1} parent=1 // pred_check
      _
    $region19: #{tpu_custom_call.1} parent=1 // pred_check_branch
      %21 = sbr.rel (0) target = $region21
    $region20: #{tpu_custom_call.1} parent=1 // pred_region
      _
    $region21: #{tpu_custom_call.1} parent=1 // pred_fallthru
      _
    // Predicated region
    $region22: #{tpu_custom_call.1} parent=1 // pred_check
      _
    $region23: #{tpu_custom_call.1} parent=1 // pred_check_branch
      %23 = sbr.rel (0) target = $region25
    $region24: #{tpu_custom_call.1} parent=1 // pred_region
      _
    $region25: #{tpu_custom_call.1} parent=1 // pred_fallthru
      _
    %v24 = vld [vmem:[%s0] sm:$0x7]
    %v25 = vld [vmem:[%s1] sm:$0xff]
    %v26 = vld [vmem:[%s1 + $0x8] sm:$0xff]
    %v27 = vld [vmem:[%s1 + $0x10] sm:$0xff]
    %v28 = vld [vmem:[%s1 + $0x18] sm:$0xff]
    %30 = vset.pattern.permute.xlu0 0
    %31 = vperm.xlu0 %30, %v25
    %v32 = vpop.permute.xlu0 %31
    %35 = vset.pattern.permute.xlu0 0
    %36 = vperm.xlu0 %35, %v26
    %v37 = vpop.permute.xlu0 %36
    %40 = vset.pattern.permute.xlu0 0
    %41 = vperm.xlu0 %40, %v27
    %v42 = vpop.permute.xlu0 %41
    %45 = vset.pattern.permute.xlu0 0
    %46 = vperm.xlu0 %45, %v28
    %v47 = vpop.permute.xlu0 %46
    %v49 = vlaneseq
    %v50 = vshrl.u32 %v49, 7
    %v51 = vsub.s32 0, %v50
    %v52 = vrot.slane %v24, %v51
    %v53 = vmul.f32 %v32, %v52
    %v54 = vmul.f32 %v37, %v52
    %v55 = vmul.f32 %v42, %v52
    %v56 = vmul.f32 %v47, %v52
    %57 = vset.pattern.permute.xlu0 1
    %58 = vperm.xlu0 %57, %v25
    %v59 = vpop.permute.xlu0 %58
    %61 = vset.pattern.permute.xlu0 1
    %62 = vperm.xlu0 %61, %v26
    %v63 = vpop.permute.xlu0 %62
    %65 = vset.pattern.permute.xlu0 1
    %66 = vperm.xlu0 %65, %v27
    %v67 = vpop.permute.xlu0 %66
    %69 = vset.pattern.permute.xlu0 1
    %70 = vperm.xlu0 %69, %v28
    %v71 = vpop.permute.xlu0 %70
    %v73 = vlaneseq
    %v74 = vshrl.u32 %v73, 7
    %v75 = vsub.s32 1, %v74
    %v76 = vrot.slane %v24, %v75
    %v77 = vmul.f32 %v59, %v76
    %v78 = vmul.f32 %v63, %v76
    %v79 = vmul.f32 %v67, %v76
    %v80 = vmul.f32 %v71, %v76
    %v81 = vadd.f32 %v53, %v77
    %v82 = vadd.f32 %v54, %v78
    %v83 = vadd.f32 %v55, %v79
    %v84 = vadd.f32 %v56, %v80
    %85 = vset.pattern.permute.xlu0 2
    %86 = vperm.xlu0 %85, %v25
    %v87 = vpop.permute.xlu0 %86
    %89 = vset.pattern.permute.xlu0 2
    %90 = vperm.xlu0 %89, %v26
    %v91 = vpop.permute.xlu0 %90
    %93 = vset.pattern.permute.xlu0 2
    %94 = vperm.xlu0 %93, %v27
    %v95 = vpop.permute.xlu0 %94
    %97 = vset.pattern.permute.xlu0 2
    %98 = vperm.xlu0 %97, %v28
    %v99 = vpop.permute.xlu0 %98
    %v101 = vlaneseq
    %v102 = vshrl.u32 %v101, 7
    %v103 = vsub.s32 2, %v102
    %v104 = vrot.slane %v24, %v103
    %v105 = vmul.f32 %v87, %v104
    %v106 = vmul.f32 %v91, %v104
    %v107 = vmul.f32 %v95, %v104
    %v108 = vmul.f32 %v99, %v104
    %v109 = vadd.f32 %v81, %v105
    %v110 = vadd.f32 %v82, %v106
    %v111 = vadd.f32 %v83, %v107
    %v112 = vadd.f32 %v84, %v108
    %v113 = vld [vmem:[%s5] sm:$0xff]
    %v114 = vld [vmem:[%s5 + $0x8] sm:$0xff]
    %v115 = vld [vmem:[%s5 + $0x10] sm:$0xff]
    %v116 = vld [vmem:[%s5 + $0x18] sm:$0xff]
    %118 = vset.pattern.permute.xlu0 0
    %119 = vperm.xlu0 %118, %v113
    %v120 = vpop.permute.xlu0 %119
    %123 = vset.pattern.permute.xlu0 0
    %124 = vperm.xlu0 %123, %v114
    %v125 = vpop.permute.xlu0 %124
    %128 = vset.pattern.permute.xlu0 0
    %129 = vperm.xlu0 %128, %v115
    %v130 = vpop.permute.xlu0 %129
    %133 = vset.pattern.permute.xlu0 0
    %134 = vperm.xlu0 %133, %v116
    %v135 = vpop.permute.xlu0 %134
    %v137 = vadd.f32 %v109, %v120
    %v138 = vadd.f32 %v110, %v125
    %v139 = vadd.f32 %v111, %v130
    %v140 = vadd.f32 %v112, %v135
    %v141 = vtanh.pop %v137
    %v142 = vtanh.pop %v138
    %v143 = vtanh.pop %v139
    %v144 = vtanh.pop %v140
    %v145 = vld [vmem:[%s2] sm:$0xff]
    %v146 = vld [vmem:[%s2 + $0x8] sm:$0xff]
    %v147 = vld [vmem:[%s2 + $0x10] sm:$0xff]
    %v148 = vld [vmem:[%s2 + $0x18] sm:$0xff]
    %149 = vset.pattern.permute.xlu0 1
    %150 = vperm.xlu0 %149, %v113
    %v151 = vpop.permute.xlu0 %150
    %153 = vset.pattern.permute.xlu0 1
    %154 = vperm.xlu0 %153, %v114
    %v155 = vpop.permute.xlu0 %154
    %157 = vset.pattern.permute.xlu0 1
    %158 = vperm.xlu0 %157, %v115
    %v159 = vpop.permute.xlu0 %158
    %161 = vset.pattern.permute.xlu0 1
    %162 = vperm.xlu0 %161, %v116
    %v163 = vpop.permute.xlu0 %162
    %vm165 = vcmask 261120
    %v167 = vsel %vm165, %v145, 0
    %v170 = vsel %vm165, %v146, 0
    %v173 = vsel %vm165, %v147, 0
    %v176 = vsel %vm165, %v148, 0
    %178 = vmatprep.subr.mxu0 0.0
    %179 = vmatpush1.msra.mxu0 0.0
    %180 = vmatprep.subr.mxu0 0.0
    %181 = vmatpush1.msra.mxu0 0.0
    %182 = vmatprep.subr.mxu0 0.0
    %183 = vmatpush1.msra.mxu0 0.0
    %184 = vmatprep.subr.mxu0 0.0
    %185 = vmatpush1.msra.mxu0 0.0
    %186 = vmatprep.subr.mxu0 0.0
    %187 = vmatpush1.msra.mxu0 0.0
    %188 = vmatprep.subr.mxu0 0.0
    %189 = vmatpush1.msra.mxu0 0.0
    %190 = vmatprep.subr.mxu0 0.0
    %191 = vmatpush1.msra.mxu0 0.0
    %192 = vmatprep.subr.mxu0 0.0
    %193 = vmatpush1.msra.mxu0 0.0
    %194 = vmatprep.subr.mxu0 0.0
    %195 = vmatpush1.msra.mxu0 0.0
    %196 = vmatprep.subr.mxu0 0.0
    %197 = vmatpush1.msra.mxu0 0.0
    %198 = vmatprep.subr.mxu0 0.0
    %199 = vmatpush1.msra.mxu0 0.0
    %200 = vmatprep.subr.mxu0 0.0
    %201 = vmatpush1.msra.mxu0 0.0
    %202 = vmatprep.subr.mxu0 0.0
    %v203 = vand.u32 %v144, 4294901760
    %204 = vmatpush1.msra.mxu0 %v203
    %205 = vmatprep.subr.mxu0 0.0
    %v206 = vand.u32 %v143, 4294901760
    %207 = vmatpush1.msra.mxu0 %v206
    %208 = vmatprep.subr.mxu0 0.0
    %v209 = vand.u32 %v142, 4294901760
    %210 = vmatpush1.msra.mxu0 %v209
    %211 = vmatprep.subr.mxu0 0.0
    %v212 = vand.u32 %v141, 4294901760
    %213 = vmatpush1.msra.mxu0 %v212
    %214 = vmatprep.subr.mxu0 0.0
    %215 = vmatpush2.msra.mxu0 0.0
    %216 = vmatprep.subr.mxu0 0.0
    %217 = vmatpush2.msra.mxu0 0.0
    %218 = vmatprep.subr.mxu0 0.0
    %219 = vmatpush2.msra.mxu0 0.0
    %220 = vmatprep.subr.mxu0 0.0
    %221 = vmatpush2.msra.mxu0 0.0
    %222 = vmatprep.subr.mxu0 0.0
    %223 = vmatpush2.msra.mxu0 0.0
    %224 = vmatprep.subr.mxu0 0.0
    %225 = vmatpush2.msra.mxu0 0.0
    %226 = vmatprep.subr.mxu0 0.0
    %227 = vmatpush2.msra.mxu0 0.0
    %228 = vmatprep.subr.mxu0 0.0
    %229 = vmatpush2.msra.mxu0 0.0
    %230 = vmatprep.subr.mxu0 0.0
    %231 = vmatpush2.msra.mxu0 0.0
    %232 = vmatprep.subr.mxu0 0.0
    %233 = vmatpush2.msra.mxu0 0.0
    %234 = vmatprep.subr.mxu0 0.0
    %235 = vmatpush2.msra.mxu0 0.0
    %236 = vmatprep.subr.mxu0 0.0
    %237 = vmatpush2.msra.mxu0 0.0
    %238 = vmatprep.subr.mxu0 0.0
    %239 = vmatpush2.msra.mxu0 0.0
    %240 = vmatprep.subr.mxu0 0.0
    %241 = vmatpush2.msra.mxu0 0.0
    %242 = vmatprep.subr.mxu0 0.0
    %243 = vmatpush2.msra.mxu0 0.0
    %244 = vmatprep.subr.mxu0 0.0
    %245 = vmatpush2.msra.mxu0 0.0
    %246 = vmatprep.mubr.f32.mxu0 0.0
    %v247 = vand.u32 %v167, 4294901760
    %v248 = vsub.f32 %v167, %v247
    %v249 = vand.u32 %v248, 4294901760
    %v250 = vsub.f32 %v248, %v249
    %v251 = vand.u32 %v250, 4294901760
    %252 = vmatmul.mubr.f32.gmra.mxu0 %v251
    %v253 = vpop.f32.mrf.mxu0
    %v254 = vadd.f32 %v151, %v253
    %v255 = vpop.f32.mrf.mxu0
    %256 = vmatprep.mubr.f32.mxu0 0.0
    %v257 = vand.u32 %v170, 4294901760
    %v258 = vsub.f32 %v170, %v257
    %v259 = vand.u32 %v258, 4294901760
    %v260 = vsub.f32 %v258, %v259
    %v261 = vand.u32 %v260, 4294901760
    %262 = vmatmul.mubr.f32.gmra.mxu0 %v261
    %v263 = vpop.f32.mrf.mxu0
    %v264 = vadd.f32 %v155, %v263
    %v265 = vpop.f32.mrf.mxu0
    %266 = vmatprep.mubr.f32.mxu0 0.0
    %v267 = vand.u32 %v173, 4294901760
    %v268 = vsub.f32 %v173, %v267
    %v269 = vand.u32 %v268, 4294901760
    %v270 = vsub.f32 %v268, %v269
    %v271 = vand.u32 %v270, 4294901760
    %272 = vmatmul.mubr.f32.gmra.mxu0 %v271
    %v273 = vpop.f32.mrf.mxu0
    %v274 = vadd.f32 %v159, %v273
    %v275 = vpop.f32.mrf.mxu0
    %276 = vmatprep.mubr.f32.mxu0 0.0
    %v277 = vand.u32 %v176, 4294901760
    %v278 = vsub.f32 %v176, %v277
    %v279 = vand.u32 %v278, 4294901760
    %v280 = vsub.f32 %v278, %v279
    %v281 = vand.u32 %v280, 4294901760
    %282 = vmatmul.mubr.f32.gmra.mxu0 %v281
    %v283 = vpop.f32.mrf.mxu0
    %v284 = vadd.f32 %v163, %v283
    %v285 = vpop.f32.mrf.mxu0
    %286 = vdwg.mxu0
    %287 = vmatprep.subr.mxu0 0.0
    %288 = vmatpush1.msra.mxu0 0.0
    %289 = vmatprep.subr.mxu0 0.0
    %290 = vmatpush1.msra.mxu0 0.0
    %291 = vmatprep.subr.mxu0 0.0
    %292 = vmatpush1.msra.mxu0 0.0
    %293 = vmatprep.subr.mxu0 0.0
    %294 = vmatpush1.msra.mxu0 0.0
    %295 = vmatprep.subr.mxu0 0.0
    %296 = vmatpush1.msra.mxu0 0.0
    %297 = vmatprep.subr.mxu0 0.0
    %298 = vmatpush1.msra.mxu0 0.0
    %299 = vmatprep.subr.mxu0 0.0
    %300 = vmatpush1.msra.mxu0 0.0
    %301 = vmatprep.subr.mxu0 0.0
    %302 = vmatpush1.msra.mxu0 0.0
    %303 = vmatprep.subr.mxu0 0.0
    %304 = vmatpush1.msra.mxu0 0.0
    %305 = vmatprep.subr.mxu0 0.0
    %306 = vmatpush1.msra.mxu0 0.0
    %307 = vmatprep.subr.mxu0 0.0
    %308 = vmatpush1.msra.mxu0 0.0
    %309 = vmatprep.subr.mxu0 0.0
    %310 = vmatpush1.msra.mxu0 0.0
    %311 = vmatprep.subr.mxu0 0.0
    %v312 = vand.u32 %v144, 4294901760
    %v313 = vsub.f32 %v144, %v312
    %v314 = vand.u32 %v313, 4294901760
    %v315 = vsub.f32 %v313, %v314
    %v316 = vand.u32 %v315, 4294901760
    %317 = vmatpush1.msra.mxu0 %v316
    %318 = vmatprep.subr.mxu0 0.0
    %v319 = vand.u32 %v143, 4294901760
    %v320 = vsub.f32 %v143, %v319
    %v321 = vand.u32 %v320, 4294901760
    %v322 = vsub.f32 %v320, %v321
    %v323 = vand.u32 %v322, 4294901760
    %324 = vmatpush1.msra.mxu0 %v323
    %325 = vmatprep.subr.mxu0 0.0
    %v326 = vand.u32 %v142, 4294901760
    %v327 = vsub.f32 %v142, %v326
    %v328 = vand.u32 %v327, 4294901760
    %v329 = vsub.f32 %v327, %v328
    %v330 = vand.u32 %v329, 4294901760
    %331 = vmatpush1.msra.mxu0 %v330
    %332 = vmatprep.subr.mxu0 0.0
    %v333 = vand.u32 %v141, 4294901760
    %v334 = vsub.f32 %v141, %v333
    %v335 = vand.u32 %v334, 4294901760
    %v336 = vsub.f32 %v334, %v335
    %v337 = vand.u32 %v336, 4294901760
    %338 = vmatpush1.msra.mxu0 %v337
    %339 = vmatprep.subr.mxu0 0.0
    %340 = vmatpush2.msra.mxu0 0.0
    %341 = vmatprep.subr.mxu0 0.0
    %342 = vmatpush2.msra.mxu0 0.0
    %343 = vmatprep.subr.mxu0 0.0
    %344 = vmatpush2.msra.mxu0 0.0
    %345 = vmatprep.subr.mxu0 0.0
    %346 = vmatpush2.msra.mxu0 0.0
    %347 = vmatprep.subr.mxu0 0.0
    %348 = vmatpush2.msra.mxu0 0.0
    %349 = vmatprep.subr.mxu0 0.0
    %350 = vmatpush2.msra.mxu0 0.0
    %351 = vmatprep.subr.mxu0 0.0
    %352 = vmatpush2.msra.mxu0 0.0
    %353 = vmatprep.subr.mxu0 0.0
    %354 = vmatpush2.msra.mxu0 0.0
    %355 = vmatprep.subr.mxu0 0.0
    %356 = vmatpush2.msra.mxu0 0.0
    %357 = vmatprep.subr.mxu0 0.0
    %358 = vmatpush2.msra.mxu0 0.0
    %359 = vmatprep.subr.mxu0 0.0
    %360 = vmatpush2.msra.mxu0 0.0
    %361 = vmatprep.subr.mxu0 0.0
    %362 = vmatpush2.msra.mxu0 0.0
    %363 = vmatprep.subr.mxu0 0.0
    %364 = vmatpush2.msra.mxu0 0.0
    %365 = vmatprep.subr.mxu0 0.0
    %366 = vmatpush2.msra.mxu0 0.0
    %367 = vmatprep.subr.mxu0 0.0
    %368 = vmatpush2.msra.mxu0 0.0
    %369 = vmatprep.subr.mxu0 0.0
    %370 = vmatpush2.msra.mxu0 0.0
    %371 = vmatprep.mubr.f32.mxu0 0.0
    %v372 = vand.u32 %v167, 4294901760
    %373 = vmatmul.mubr.f32.gmra.mxu0 %v372
    %v374 = vpop.f32.mrf.mxu0
    %v375 = vadd.f32 %v254, %v374
    %v376 = vpop.f32.mrf.mxu0
    %377 = vmatprep.mubr.f32.mxu0 0.0
    %v378 = vand.u32 %v170, 4294901760
    %379 = vmatmul.mubr.f32.gmra.mxu0 %v378
    %v380 = vpop.f32.mrf.mxu0
    %v381 = vadd.f32 %v264, %v380
    %v382 = vpop.f32.mrf.mxu0
    %383 = vmatprep.mubr.f32.mxu0 0.0
    %v384 = vand.u32 %v173, 4294901760
    %385 = vmatmul.mubr.f32.gmra.mxu0 %v384
    %v386 = vpop.f32.mrf.mxu0
    %v387 = vadd.f32 %v274, %v386
    %v388 = vpop.f32.mrf.mxu0
    %389 = vmatprep.mubr.f32.mxu0 0.0
    %v390 = vand.u32 %v176, 4294901760
    %391 = vmatmul.mubr.f32.gmra.mxu0 %v390
    %v392 = vpop.f32.mrf.mxu0
    %v393 = vadd.f32 %v284, %v392
    %v394 = vpop.f32.mrf.mxu0
    %395 = vdwg.mxu0
    %396 = vmatprep.subr.mxu0 0.0
    %397 = vmatpush1.msra.mxu0 0.0
    %398 = vmatprep.subr.mxu0 0.0
    %399 = vmatpush1.msra.mxu0 0.0
    %400 = vmatprep.subr.mxu0 0.0
    %401 = vmatpush1.msra.mxu0 0.0
    %402 = vmatprep.subr.mxu0 0.0
    %403 = vmatpush1.msra.mxu0 0.0
    %404 = vmatprep.subr.mxu0 0.0
    %405 = vmatpush1.msra.mxu0 0.0
    %406 = vmatprep.subr.mxu0 0.0
    %407 = vmatpush1.msra.mxu0 0.0
    %408 = vmatprep.subr.mxu0 0.0
    %409 = vmatpush1.msra.mxu0 0.0
    %410 = vmatprep.subr.mxu0 0.0
    %411 = vmatpush1.msra.mxu0 0.0
    %412 = vmatprep.subr.mxu0 0.0
    %413 = vmatpush1.msra.mxu0 0.0
    %414 = vmatprep.subr.mxu0 0.0
    %415 = vmatpush1.msra.mxu0 0.0
    %416 = vmatprep.subr.mxu0 0.0
    %417 = vmatpush1.msra.mxu0 0.0
    %418 = vmatprep.subr.mxu0 0.0
    %419 = vmatpush1.msra.mxu0 0.0
    %420 = vmatprep.subr.mxu0 0.0
    %v421 = vand.u32 %v144, 4294901760
    %v422 = vsub.f32 %v144, %v421
    %423 = vmatpush1.msra.mxu0 %v422
    %424 = vmatprep.subr.mxu0 0.0
    %v425 = vand.u32 %v143, 4294901760
    %v426 = vsub.f32 %v143, %v425
    %427 = vmatpush1.msra.mxu0 %v426
    %428 = vmatprep.subr.mxu0 0.0
    %v429 = vand.u32 %v142, 4294901760
    %v430 = vsub.f32 %v142, %v429
    %431 = vmatpush1.msra.mxu0 %v430
    %432 = vmatprep.subr.mxu0 0.0
    %v433 = vand.u32 %v141, 4294901760
    %v434 = vsub.f32 %v141, %v433
    %435 = vmatpush1.msra.mxu0 %v434
    %436 = vmatprep.subr.mxu0 0.0
    %437 = vmatpush2.msra.mxu0 0.0
    %438 = vmatprep.subr.mxu0 0.0
    %439 = vmatpush2.msra.mxu0 0.0
    %440 = vmatprep.subr.mxu0 0.0
    %441 = vmatpush2.msra.mxu0 0.0
    %442 = vmatprep.subr.mxu0 0.0
    %443 = vmatpush2.msra.mxu0 0.0
    %444 = vmatprep.subr.mxu0 0.0
    %445 = vmatpush2.msra.mxu0 0.0
    %446 = vmatprep.subr.mxu0 0.0
    %447 = vmatpush2.msra.mxu0 0.0
    %448 = vmatprep.subr.mxu0 0.0
    %449 = vmatpush2.msra.mxu0 0.0
    %450 = vmatprep.subr.mxu0 0.0
    %451 = vmatpush2.msra.mxu0 0.0
    %452 = vmatprep.subr.mxu0 0.0
    %453 = vmatpush2.msra.mxu0 0.0
    %454 = vmatprep.subr.mxu0 0.0
    %455 = vmatpush2.msra.mxu0 0.0
    %456 = vmatprep.subr.mxu0 0.0
    %457 = vmatpush2.msra.mxu0 0.0
    %458 = vmatprep.subr.mxu0 0.0
    %459 = vmatpush2.msra.mxu0 0.0
    %460 = vmatprep.subr.mxu0 0.0
    %461 = vmatpush2.msra.mxu0 0.0
    %462 = vmatprep.subr.mxu0 0.0
    %463 = vmatpush2.msra.mxu0 0.0
    %464 = vmatprep.subr.mxu0 0.0
    %465 = vmatpush2.msra.mxu0 0.0
    %466 = vmatprep.subr.mxu0 0.0
    %467 = vmatpush2.msra.mxu0 0.0
    %468 = vmatprep.mubr.f32.mxu0 0.0
    %v469 = vand.u32 %v167, 4294901760
    %v470 = vsub.f32 %v167, %v469
    %471 = vmatmul.mubr.f32.gmra.mxu0 %v470
    %v472 = vpop.f32.mrf.mxu0
    %v473 = vadd.f32 %v375, %v472
    %v474 = vpop.f32.mrf.mxu0
    %475 = vmatprep.mubr.f32.mxu0 0.0
    %v476 = vand.u32 %v170, 4294901760
    %v477 = vsub.f32 %v170, %v476
    %478 = vmatmul.mubr.f32.gmra.mxu0 %v477
    %v479 = vpop.f32.mrf.mxu0
    %v480 = vadd.f32 %v381, %v479
    %v481 = vpop.f32.mrf.mxu0
    %482 = vmatprep.mubr.f32.mxu0 0.0
    %v483 = vand.u32 %v173, 4294901760
    %v484 = vsub.f32 %v173, %v483
    %485 = vmatmul.mubr.f32.gmra.mxu0 %v484
    %v486 = vpop.f32.mrf.mxu0
    %v487 = vadd.f32 %v387, %v486
    %v488 = vpop.f32.mrf.mxu0
    %489 = vmatprep.mubr.f32.mxu0 0.0
    %v490 = vand.u32 %v176, 4294901760
    %v491 = vsub.f32 %v176, %v490
    %492 = vmatmul.mubr.f32.gmra.mxu0 %v491
    %v493 = vpop.f32.mrf.mxu0
    %v494 = vadd.f32 %v393, %v493
    %v495 = vpop.f32.mrf.mxu0
    %496 = vdwg.mxu0
    %497 = vmatprep.subr.mxu0 0.0
    %498 = vmatpush1.msra.mxu0 0.0
    %499 = vmatprep.subr.mxu0 0.0
    %500 = vmatpush1.msra.mxu0 0.0
    %501 = vmatprep.subr.mxu0 0.0
    %502 = vmatpush1.msra.mxu0 0.0
    %503 = vmatprep.subr.mxu0 0.0
    %504 = vmatpush1.msra.mxu0 0.0
    %505 = vmatprep.subr.mxu0 0.0
    %506 = vmatpush1.msra.mxu0 0.0
    %507 = vmatprep.subr.mxu0 0.0
    %508 = vmatpush1.msra.mxu0 0.0
    %509 = vmatprep.subr.mxu0 0.0
    %510 = vmatpush1.msra.mxu0 0.0
    %511 = vmatprep.subr.mxu0 0.0
    %512 = vmatpush1.msra.mxu0 0.0
    %513 = vmatprep.subr.mxu0 0.0
    %514 = vmatpush1.msra.mxu0 0.0
    %515 = vmatprep.subr.mxu0 0.0
    %516 = vmatpush1.msra.mxu0 0.0
    %517 = vmatprep.subr.mxu0 0.0
    %518 = vmatpush1.msra.mxu0 0.0
    %519 = vmatprep.subr.mxu0 0.0
    %520 = vmatpush1.msra.mxu0 0.0
    %521 = vmatprep.subr.mxu0 0.0
    %v522 = vand.u32 %v144, 4294901760
    %523 = vmatpush1.msra.mxu0 %v522
    %524 = vmatprep.subr.mxu0 0.0
    %v525 = vand.u32 %v143, 4294901760
    %526 = vmatpush1.msra.mxu0 %v525
    %527 = vmatprep.subr.mxu0 0.0
    %v528 = vand.u32 %v142, 4294901760
    %529 = vmatpush1.msra.mxu0 %v528
    %530 = vmatprep.subr.mxu0 0.0
    %v531 = vand.u32 %v141, 4294901760
    %532 = vmatpush1.msra.mxu0 %v531
    %533 = vmatprep.subr.mxu0 0.0
    %534 = vmatpush2.msra.mxu0 0.0
    %535 = vmatprep.subr.mxu0 0.0
    %536 = vmatpush2.msra.mxu0 0.0
    %537 = vmatprep.subr.mxu0 0.0
    %538 = vmatpush2.msra.mxu0 0.0
    %539 = vmatprep.subr.mxu0 0.0
    %540 = vmatpush2.msra.mxu0 0.0
    %541 = vmatprep.subr.mxu0 0.0
    %542 = vmatpush2.msra.mxu0 0.0
    %543 = vmatprep.subr.mxu0 0.0
    %544 = vmatpush2.msra.mxu0 0.0
    %545 = vmatprep.subr.mxu0 0.0
    %546 = vmatpush2.msra.mxu0 0.0
    %547 = vmatprep.subr.mxu0 0.0
    %548 = vmatpush2.msra.mxu0 0.0
    %549 = vmatprep.subr.mxu0 0.0
    %550 = vmatpush2.msra.mxu0 0.0
    %551 = vmatprep.subr.mxu0 0.0
    %552 = vmatpush2.msra.mxu0 0.0
    %553 = vmatprep.subr.mxu0 0.0
    %554 = vmatpush2.msra.mxu0 0.0
    %555 = vmatprep.subr.mxu0 0.0
    %556 = vmatpush2.msra.mxu0 0.0
    %557 = vmatprep.subr.mxu0 0.0
    %558 = vmatpush2.msra.mxu0 0.0
    %559 = vmatprep.subr.mxu0 0.0
    %560 = vmatpush2.msra.mxu0 0.0
    %561 = vmatprep.subr.mxu0 0.0
    %562 = vmatpush2.msra.mxu0 0.0
    %563 = vmatprep.subr.mxu0 0.0
    %564 = vmatpush2.msra.mxu0 0.0
    %565 = vmatprep.mubr.f32.mxu0 0.0
    %v566 = vand.u32 %v167, 4294901760
    %v567 = vsub.f32 %v167, %v566
    %v568 = vand.u32 %v567, 4294901760
    %569 = vmatmul.mubr.f32.gmra.mxu0 %v568
    %v570 = vpop.f32.mrf.mxu0
    %v571 = vadd.f32 %v473, %v570
    %v572 = vpop.f32.mrf.mxu0
    %573 = vmatprep.mubr.f32.mxu0 0.0
    %v574 = vand.u32 %v170, 4294901760
    %v575 = vsub.f32 %v170, %v574
    %v576 = vand.u32 %v575, 4294901760
    %577 = vmatmul.mubr.f32.gmra.mxu0 %v576
    %v578 = vpop.f32.mrf.mxu0
    %v579 = vadd.f32 %v480, %v578
    %v580 = vpop.f32.mrf.mxu0
    %581 = vmatprep.mubr.f32.mxu0 0.0
    %v582 = vand.u32 %v173, 4294901760
    %v583 = vsub.f32 %v173, %v582
    %v584 = vand.u32 %v583, 4294901760
    %585 = vmatmul.mubr.f32.gmra.mxu0 %v584
    %v586 = vpop.f32.mrf.mxu0
    %v587 = vadd.f32 %v487, %v586
    %v588 = vpop.f32.mrf.mxu0
    %589 = vmatprep.mubr.f32.mxu0 0.0
    %v590 = vand.u32 %v176, 4294901760
    %v591 = vsub.f32 %v176, %v590
    %v592 = vand.u32 %v591, 4294901760
    %593 = vmatmul.mubr.f32.gmra.mxu0 %v592
    %v594 = vpop.f32.mrf.mxu0
    %v595 = vadd.f32 %v494, %v594
    %v596 = vpop.f32.mrf.mxu0
    %597 = vdwg.mxu0
    %598 = vmatprep.subr.mxu0 0.0
    %599 = vmatpush1.msra.mxu0 0.0
    %600 = vmatprep.subr.mxu0 0.0
    %601 = vmatpush1.msra.mxu0 0.0
    %602 = vmatprep.subr.mxu0 0.0
    %603 = vmatpush1.msra.mxu0 0.0
    %604 = vmatprep.subr.mxu0 0.0
    %605 = vmatpush1.msra.mxu0 0.0
    %606 = vmatprep.subr.mxu0 0.0
    %607 = vmatpush1.msra.mxu0 0.0
    %608 = vmatprep.subr.mxu0 0.0
    %609 = vmatpush1.msra.mxu0 0.0
    %610 = vmatprep.subr.mxu0 0.0
    %611 = vmatpush1.msra.mxu0 0.0
    %612 = vmatprep.subr.mxu0 0.0
    %613 = vmatpush1.msra.mxu0 0.0
    %614 = vmatprep.subr.mxu0 0.0
    %615 = vmatpush1.msra.mxu0 0.0
    %616 = vmatprep.subr.mxu0 0.0
    %617 = vmatpush1.msra.mxu0 0.0
    %618 = vmatprep.subr.mxu0 0.0
    %619 = vmatpush1.msra.mxu0 0.0
    %620 = vmatprep.subr.mxu0 0.0
    %621 = vmatpush1.msra.mxu0 0.0
    %622 = vmatprep.subr.mxu0 0.0
    %v623 = vand.u32 %v144, 4294901760
    %v624 = vsub.f32 %v144, %v623
    %v625 = vand.u32 %v624, 4294901760
    %626 = vmatpush1.msra.mxu0 %v625
    %627 = vmatprep.subr.mxu0 0.0
    %v628 = vand.u32 %v143, 4294901760
    %v629 = vsub.f32 %v143, %v628
    %v630 = vand.u32 %v629, 4294901760
    %631 = vmatpush1.msra.mxu0 %v630
    %632 = vmatprep.subr.mxu0 0.0
    %v633 = vand.u32 %v142, 4294901760
    %v634 = vsub.f32 %v142, %v633
    %v635 = vand.u32 %v634, 4294901760
    %636 = vmatpush1.msra.mxu0 %v635
    %637 = vmatprep.subr.mxu0 0.0
    %v638 = vand.u32 %v141, 4294901760
    %v639 = vsub.f32 %v141, %v638
    %v640 = vand.u32 %v639, 4294901760
    %641 = vmatpush1.msra.mxu0 %v640
    %642 = vmatprep.subr.mxu0 0.0
    %643 = vmatpush2.msra.mxu0 0.0
    %644 = vmatprep.subr.mxu0 0.0
    %645 = vmatpush2.msra.mxu0 0.0
    %646 = vmatprep.subr.mxu0 0.0
    %647 = vmatpush2.msra.mxu0 0.0
    %648 = vmatprep.subr.mxu0 0.0
    %649 = vmatpush2.msra.mxu0 0.0
    %650 = vmatprep.subr.mxu0 0.0
    %651 = vmatpush2.msra.mxu0 0.0
    %652 = vmatprep.subr.mxu0 0.0
    %653 = vmatpush2.msra.mxu0 0.0
    %654 = vmatprep.subr.mxu0 0.0
    %655 = vmatpush2.msra.mxu0 0.0
    %656 = vmatprep.subr.mxu0 0.0
    %657 = vmatpush2.msra.mxu0 0.0
    %658 = vmatprep.subr.mxu0 0.0
    %659 = vmatpush2.msra.mxu0 0.0
    %660 = vmatprep.subr.mxu0 0.0
    %661 = vmatpush2.msra.mxu0 0.0
    %662 = vmatprep.subr.mxu0 0.0
    %663 = vmatpush2.msra.mxu0 0.0
    %664 = vmatprep.subr.mxu0 0.0
    %665 = vmatpush2.msra.mxu0 0.0
    %666 = vmatprep.subr.mxu0 0.0
    %667 = vmatpush2.msra.mxu0 0.0
    %668 = vmatprep.subr.mxu0 0.0
    %669 = vmatpush2.msra.mxu0 0.0
    %670 = vmatprep.subr.mxu0 0.0
    %671 = vmatpush2.msra.mxu0 0.0
    %672 = vmatprep.subr.mxu0 0.0
    %673 = vmatpush2.msra.mxu0 0.0
    %674 = vmatprep.mubr.f32.mxu0 0.0
    %v675 = vand.u32 %v167, 4294901760
    %676 = vmatmul.mubr.f32.gmra.mxu0 %v675
    %v677 = vpop.f32.mrf.mxu0
    %v678 = vadd.f32 %v571, %v677
    %v679 = vpop.f32.mrf.mxu0
    %680 = vmatprep.mubr.f32.mxu0 0.0
    %v681 = vand.u32 %v170, 4294901760
    %682 = vmatmul.mubr.f32.gmra.mxu0 %v681
    %v683 = vpop.f32.mrf.mxu0
    %v684 = vadd.f32 %v579, %v683
    %v685 = vpop.f32.mrf.mxu0
    %686 = vmatprep.mubr.f32.mxu0 0.0
    %v687 = vand.u32 %v173, 4294901760
    %688 = vmatmul.mubr.f32.gmra.mxu0 %v687
    %v689 = vpop.f32.mrf.mxu0
    %v690 = vadd.f32 %v587, %v689
    %v691 = vpop.f32.mrf.mxu0
    %692 = vmatprep.mubr.f32.mxu0 0.0
    %v693 = vand.u32 %v176, 4294901760
    %694 = vmatmul.mubr.f32.gmra.mxu0 %v693
    %v695 = vpop.f32.mrf.mxu0
    %v696 = vadd.f32 %v595, %v695
    %v697 = vpop.f32.mrf.mxu0
    %698 = vdwg.mxu0
    %699 = vmatprep.subr.mxu0 0.0
    %700 = vmatpush1.msra.mxu0 0.0
    %701 = vmatprep.subr.mxu0 0.0
    %702 = vmatpush1.msra.mxu0 0.0
    %703 = vmatprep.subr.mxu0 0.0
    %704 = vmatpush1.msra.mxu0 0.0
    %705 = vmatprep.subr.mxu0 0.0
    %706 = vmatpush1.msra.mxu0 0.0
    %707 = vmatprep.subr.mxu0 0.0
    %708 = vmatpush1.msra.mxu0 0.0
    %709 = vmatprep.subr.mxu0 0.0
    %710 = vmatpush1.msra.mxu0 0.0
    %711 = vmatprep.subr.mxu0 0.0
    %712 = vmatpush1.msra.mxu0 0.0
    %713 = vmatprep.subr.mxu0 0.0
    %714 = vmatpush1.msra.mxu0 0.0
    %715 = vmatprep.subr.mxu0 0.0
    %716 = vmatpush1.msra.mxu0 0.0
    %717 = vmatprep.subr.mxu0 0.0
    %718 = vmatpush1.msra.mxu0 0.0
    %719 = vmatprep.subr.mxu0 0.0
    %720 = vmatpush1.msra.mxu0 0.0
    %721 = vmatprep.subr.mxu0 0.0
    %722 = vmatpush1.msra.mxu0 0.0
    %723 = vmatprep.subr.mxu0 0.0
    %v724 = vand.u32 %v144, 4294901760
    %725 = vmatpush1.msra.mxu0 %v724
    %726 = vmatprep.subr.mxu0 0.0
    %v727 = vand.u32 %v143, 4294901760
    %728 = vmatpush1.msra.mxu0 %v727
    %729 = vmatprep.subr.mxu0 0.0
    %v730 = vand.u32 %v142, 4294901760
    %731 = vmatpush1.msra.mxu0 %v730
    %732 = vmatprep.subr.mxu0 0.0
    %v733 = vand.u32 %v141, 4294901760
    %734 = vmatpush1.msra.mxu0 %v733
    %735 = vmatprep.subr.mxu0 0.0
    %736 = vmatpush2.msra.mxu0 0.0
    %737 = vmatprep.subr.mxu0 0.0
    %738 = vmatpush2.msra.mxu0 0.0
    %739 = vmatprep.subr.mxu0 0.0
    %740 = vmatpush2.msra.mxu0 0.0
    %741 = vmatprep.subr.mxu0 0.0
    %742 = vmatpush2.msra.mxu0 0.0
    %743 = vmatprep.subr.mxu0 0.0
    %744 = vmatpush2.msra.mxu0 0.0
    %745 = vmatprep.subr.mxu0 0.0
    %746 = vmatpush2.msra.mxu0 0.0
    %747 = vmatprep.subr.mxu0 0.0
    %748 = vmatpush2.msra.mxu0 0.0
    %749 = vmatprep.subr.mxu0 0.0
    %750 = vmatpush2.msra.mxu0 0.0
    %751 = vmatprep.subr.mxu0 0.0
    %752 = vmatpush2.msra.mxu0 0.0
    %753 = vmatprep.subr.mxu0 0.0
    %754 = vmatpush2.msra.mxu0 0.0
    %755 = vmatprep.subr.mxu0 0.0
    %756 = vmatpush2.msra.mxu0 0.0
    %757 = vmatprep.subr.mxu0 0.0
    %758 = vmatpush2.msra.mxu0 0.0
    %759 = vmatprep.subr.mxu0 0.0
    %760 = vmatpush2.msra.mxu0 0.0
    %761 = vmatprep.subr.mxu0 0.0
    %762 = vmatpush2.msra.mxu0 0.0
    %763 = vmatprep.subr.mxu0 0.0
    %764 = vmatpush2.msra.mxu0 0.0
    %765 = vmatprep.subr.mxu0 0.0
    %766 = vmatpush2.msra.mxu0 0.0
    %767 = vmatprep.mubr.f32.mxu0 0.0
    %v768 = vand.u32 %v167, 4294901760
    %769 = vmatmul.mubr.f32.gmra.mxu0 %v768
    %v770 = vpop.f32.mrf.mxu0
    %v771 = vadd.f32 %v678, %v770
    %v772 = vpop.f32.mrf.mxu0
    %773 = vmatprep.mubr.f32.mxu0 0.0
    %v774 = vand.u32 %v170, 4294901760
    %775 = vmatmul.mubr.f32.gmra.mxu0 %v774
    %v776 = vpop.f32.mrf.mxu0
    %v777 = vadd.f32 %v684, %v776
    %v778 = vpop.f32.mrf.mxu0
    %779 = vmatprep.mubr.f32.mxu0 0.0
    %v780 = vand.u32 %v173, 4294901760
    %781 = vmatmul.mubr.f32.gmra.mxu0 %v780
    %v782 = vpop.f32.mrf.mxu0
    %v783 = vadd.f32 %v690, %v782
    %v784 = vpop.f32.mrf.mxu0
    %785 = vmatprep.mubr.f32.mxu0 0.0
    %v786 = vand.u32 %v176, 4294901760
    %787 = vmatmul.mubr.f32.gmra.mxu0 %v786
    %v788 = vpop.f32.mrf.mxu0
    %v789 = vadd.f32 %v696, %v788
    %v790 = vpop.f32.mrf.mxu0
    %791 = vdwg.mxu0
    %v792 = vtanh.pop %v771
    %v793 = vtanh.pop %v777
    %v794 = vtanh.pop %v783
    %v795 = vtanh.pop %v789
    %v796 = vld [vmem:[%s3] sm:$0xff]
    %v797 = vld [vmem:[%s3 + $0x8] sm:$0xff]
    %v798 = vld [vmem:[%s3 + $0x10] sm:$0xff]
    %v799 = vld [vmem:[%s3 + $0x18] sm:$0xff]
    %800 = vset.pattern.permute.xlu0 2
    %801 = vperm.xlu0 %800, %v113
    %v802 = vpop.permute.xlu0 %801
    %804 = vset.pattern.permute.xlu0 2
    %805 = vperm.xlu0 %804, %v114
    %v806 = vpop.permute.xlu0 %805
    %808 = vset.pattern.permute.xlu0 2
    %809 = vperm.xlu0 %808, %v115
    %v810 = vpop.permute.xlu0 %809
    %812 = vset.pattern.permute.xlu0 2
    %813 = vperm.xlu0 %812, %v116
    %v814 = vpop.permute.xlu0 %813
    %v817 = vsel %vm165, %v796, 0
    %v820 = vsel %vm165, %v797, 0
    %v823 = vsel %vm165, %v798, 0
    %v826 = vsel %vm165, %v799, 0
    %828 = vmatprep.subr.mxu0 0.0
    %829 = vmatpush1.msra.mxu0 0.0
    %830 = vmatprep.subr.mxu0 0.0
    %831 = vmatpush1.msra.mxu0 0.0
    %832 = vmatprep.subr.mxu0 0.0
    %833 = vmatpush1.msra.mxu0 0.0
    %834 = vmatprep.subr.mxu0 0.0
    %835 = vmatpush1.msra.mxu0 0.0
    %836 = vmatprep.subr.mxu0 0.0
    %837 = vmatpush1.msra.mxu0 0.0
    %838 = vmatprep.subr.mxu0 0.0
    %839 = vmatpush1.msra.mxu0 0.0
    %840 = vmatprep.subr.mxu0 0.0
    %841 = vmatpush1.msra.mxu0 0.0
    %842 = vmatprep.subr.mxu0 0.0
    %843 = vmatpush1.msra.mxu0 0.0
    %844 = vmatprep.subr.mxu0 0.0
    %845 = vmatpush1.msra.mxu0 0.0
    %846 = vmatprep.subr.mxu0 0.0
    %847 = vmatpush1.msra.mxu0 0.0
    %848 = vmatprep.subr.mxu0 0.0
    %849 = vmatpush1.msra.mxu0 0.0
    %850 = vmatprep.subr.mxu0 0.0
    %851 = vmatpush1.msra.mxu0 0.0
    %852 = vmatprep.subr.mxu0 0.0
    %v853 = vand.u32 %v795, 4294901760
    %854 = vmatpush1.msra.mxu0 %v853
    %855 = vmatprep.subr.mxu0 0.0
    %v856 = vand.u32 %v794, 4294901760
    %857 = vmatpush1.msra.mxu0 %v856
    %858 = vmatprep.subr.mxu0 0.0
    %v859 = vand.u32 %v793, 4294901760
    %860 = vmatpush1.msra.mxu0 %v859
    %861 = vmatprep.subr.mxu0 0.0
    %v862 = vand.u32 %v792, 4294901760
    %863 = vmatpush1.msra.mxu0 %v862
    %864 = vmatprep.subr.mxu0 0.0
    %865 = vmatpush2.msra.mxu0 0.0
    %866 = vmatprep.subr.mxu0 0.0
    %867 = vmatpush2.msra.mxu0 0.0
    %868 = vmatprep.subr.mxu0 0.0
    %869 = vmatpush2.msra.mxu0 0.0
    %870 = vmatprep.subr.mxu0 0.0
    %871 = vmatpush2.msra.mxu0 0.0
    %872 = vmatprep.subr.mxu0 0.0
    %873 = vmatpush2.msra.mxu0 0.0
    %874 = vmatprep.subr.mxu0 0.0
    %875 = vmatpush2.msra.mxu0 0.0
    %876 = vmatprep.subr.mxu0 0.0
    %877 = vmatpush2.msra.mxu0 0.0
    %878 = vmatprep.subr.mxu0 0.0
    %879 = vmatpush2.msra.mxu0 0.0
    %880 = vmatprep.subr.mxu0 0.0
    %881 = vmatpush2.msra.mxu0 0.0
    %882 = vmatprep.subr.mxu0 0.0
    %883 = vmatpush2.msra.mxu0 0.0
    %884 = vmatprep.subr.mxu0 0.0
    %885 = vmatpush2.msra.mxu0 0.0
    %886 = vmatprep.subr.mxu0 0.0
    %887 = vmatpush2.msra.mxu0 0.0
    %888 = vmatprep.subr.mxu0 0.0
    %889 = vmatpush2.msra.mxu0 0.0
    %890 = vmatprep.subr.mxu0 0.0
    %891 = vmatpush2.msra.mxu0 0.0
    %892 = vmatprep.subr.mxu0 0.0
    %893 = vmatpush2.msra.mxu0 0.0
    %894 = vmatprep.subr.mxu0 0.0
    %895 = vmatpush2.msra.mxu0 0.0
    %896 = vmatprep.mubr.f32.mxu0 0.0
    %v897 = vand.u32 %v817, 4294901760
    %v898 = vsub.f32 %v817, %v897
    %v899 = vand.u32 %v898, 4294901760
    %v900 = vsub.f32 %v898, %v899
    %v901 = vand.u32 %v900, 4294901760
    %902 = vmatmul.mubr.f32.gmra.mxu0 %v901
    %v903 = vpop.f32.mrf.mxu0
    %v904 = vadd.f32 %v802, %v903
    %v905 = vpop.f32.mrf.mxu0
    %906 = vmatprep.mubr.f32.mxu0 0.0
    %v907 = vand.u32 %v820, 4294901760
    %v908 = vsub.f32 %v820, %v907
    %v909 = vand.u32 %v908, 4294901760
    %v910 = vsub.f32 %v908, %v909
    %v911 = vand.u32 %v910, 4294901760
    %912 = vmatmul.mubr.f32.gmra.mxu0 %v911
    %v913 = vpop.f32.mrf.mxu0
    %v914 = vadd.f32 %v806, %v913
    %v915 = vpop.f32.mrf.mxu0
    %916 = vmatprep.mubr.f32.mxu0 0.0
    %v917 = vand.u32 %v823, 4294901760
    %v918 = vsub.f32 %v823, %v917
    %v919 = vand.u32 %v918, 4294901760
    %v920 = vsub.f32 %v918, %v919
    %v921 = vand.u32 %v920, 4294901760
    %922 = vmatmul.mubr.f32.gmra.mxu0 %v921
    %v923 = vpop.f32.mrf.mxu0
    %v924 = vadd.f32 %v810, %v923
    %v925 = vpop.f32.mrf.mxu0
    %926 = vmatprep.mubr.f32.mxu0 0.0
    %v927 = vand.u32 %v826, 4294901760
    %v928 = vsub.f32 %v826, %v927
    %v929 = vand.u32 %v928, 4294901760
    %v930 = vsub.f32 %v928, %v929
    %v931 = vand.u32 %v930, 4294901760
    %932 = vmatmul.mubr.f32.gmra.mxu0 %v931
    %v933 = vpop.f32.mrf.mxu0
    %v934 = vadd.f32 %v814, %v933
    %v935 = vpop.f32.mrf.mxu0
    %936 = vdwg.mxu0
    %937 = vmatprep.subr.mxu0 0.0
    %938 = vmatpush1.msra.mxu0 0.0
    %939 = vmatprep.subr.mxu0 0.0
    %940 = vmatpush1.msra.mxu0 0.0
    %941 = vmatprep.subr.mxu0 0.0
    %942 = vmatpush1.msra.mxu0 0.0
    %943 = vmatprep.subr.mxu0 0.0
    %944 = vmatpush1.msra.mxu0 0.0
    %945 = vmatprep.subr.mxu0 0.0
    %946 = vmatpush1.msra.mxu0 0.0
    %947 = vmatprep.subr.mxu0 0.0
    %948 = vmatpush1.msra.mxu0 0.0
    %949 = vmatprep.subr.mxu0 0.0
    %950 = vmatpush1.msra.mxu0 0.0
    %951 = vmatprep.subr.mxu0 0.0
    %952 = vmatpush1.msra.mxu0 0.0
    %953 = vmatprep.subr.mxu0 0.0
    %954 = vmatpush1.msra.mxu0 0.0
    %955 = vmatprep.subr.mxu0 0.0
    %956 = vmatpush1.msra.mxu0 0.0
    %957 = vmatprep.subr.mxu0 0.0
    %958 = vmatpush1.msra.mxu0 0.0
    %959 = vmatprep.subr.mxu0 0.0
    %960 = vmatpush1.msra.mxu0 0.0
    %961 = vmatprep.subr.mxu0 0.0
    %v962 = vand.u32 %v795, 4294901760
    %v963 = vsub.f32 %v795, %v962
    %v964 = vand.u32 %v963, 4294901760
    %v965 = vsub.f32 %v963, %v964
    %v966 = vand.u32 %v965, 4294901760
    %967 = vmatpush1.msra.mxu0 %v966
    %968 = vmatprep.subr.mxu0 0.0
    %v969 = vand.u32 %v794, 4294901760
    %v970 = vsub.f32 %v794, %v969
    %v971 = vand.u32 %v970, 4294901760
    %v972 = vsub.f32 %v970, %v971
    %v973 = vand.u32 %v972, 4294901760
    %974 = vmatpush1.msra.mxu0 %v973
    %975 = vmatprep.subr.mxu0 0.0
    %v976 = vand.u32 %v793, 4294901760
    %v977 = vsub.f32 %v793, %v976
    %v978 = vand.u32 %v977, 4294901760
    %v979 = vsub.f32 %v977, %v978
    %v980 = vand.u32 %v979, 4294901760
    %981 = vmatpush1.msra.mxu0 %v980
    %982 = vmatprep.subr.mxu0 0.0
    %v983 = vand.u32 %v792, 4294901760
    %v984 = vsub.f32 %v792, %v983
    %v985 = vand.u32 %v984, 4294901760
    %v986 = vsub.f32 %v984, %v985
    %v987 = vand.u32 %v986, 4294901760
    %988 = vmatpush1.msra.mxu0 %v987
    %989 = vmatprep.subr.mxu0 0.0
    %990 = vmatpush2.msra.mxu0 0.0
    %991 = vmatprep.subr.mxu0 0.0
    %992 = vmatpush2.msra.mxu0 0.0
    %993 = vmatprep.subr.mxu0 0.0
    %994 = vmatpush2.msra.mxu0 0.0
    %995 = vmatprep.subr.mxu0 0.0
    %996 = vmatpush2.msra.mxu0 0.0
    %997 = vmatprep.subr.mxu0 0.0
    %998 = vmatpush2.msra.mxu0 0.0
    %999 = vmatprep.subr.mxu0 0.0
    %1000 = vmatpush2.msra.mxu0 0.0
    %1001 = vmatprep.subr.mxu0 0.0
    %1002 = vmatpush2.msra.mxu0 0.0
    %1003 = vmatprep.subr.mxu0 0.0
    %1004 = vmatpush2.msra.mxu0 0.0
    %1005 = vmatprep.subr.mxu0 0.0
    %1006 = vmatpush2.msra.mxu0 0.0
    %1007 = vmatprep.subr.mxu0 0.0
    %1008 = vmatpush2.msra.mxu0 0.0
    %1009 = vmatprep.subr.mxu0 0.0
    %1010 = vmatpush2.msra.mxu0 0.0
    %1011 = vmatprep.subr.mxu0 0.0
    %1012 = vmatpush2.msra.mxu0 0.0
    %1013 = vmatprep.subr.mxu0 0.0
    %1014 = vmatpush2.msra.mxu0 0.0
    %1015 = vmatprep.subr.mxu0 0.0
    %1016 = vmatpush2.msra.mxu0 0.0
    %1017 = vmatprep.subr.mxu0 0.0
    %1018 = vmatpush2.msra.mxu0 0.0
    %1019 = vmatprep.subr.mxu0 0.0
    %1020 = vmatpush2.msra.mxu0 0.0
    %1021 = vmatprep.mubr.f32.mxu0 0.0
    %v1022 = vand.u32 %v817, 4294901760
    %1023 = vmatmul.mubr.f32.gmra.mxu0 %v1022
    %v1024 = vpop.f32.mrf.mxu0
    %v1025 = vadd.f32 %v904, %v1024
    %v1026 = vpop.f32.mrf.mxu0
    %1027 = vmatprep.mubr.f32.mxu0 0.0
    %v1028 = vand.u32 %v820, 4294901760
    %1029 = vmatmul.mubr.f32.gmra.mxu0 %v1028
    %v1030 = vpop.f32.mrf.mxu0
    %v1031 = vadd.f32 %v914, %v1030
    %v1032 = vpop.f32.mrf.mxu0
    %1033 = vmatprep.mubr.f32.mxu0 0.0
    %v1034 = vand.u32 %v823, 4294901760
    %1035 = vmatmul.mubr.f32.gmra.mxu0 %v1034
    %v1036 = vpop.f32.mrf.mxu0
    %v1037 = vadd.f32 %v924, %v1036
    %v1038 = vpop.f32.mrf.mxu0
    %1039 = vmatprep.mubr.f32.mxu0 0.0
    %v1040 = vand.u32 %v826, 4294901760
    %1041 = vmatmul.mubr.f32.gmra.mxu0 %v1040
    %v1042 = vpop.f32.mrf.mxu0
    %v1043 = vadd.f32 %v934, %v1042
    %v1044 = vpop.f32.mrf.mxu0
    %1045 = vdwg.mxu0
    %1046 = vmatprep.subr.mxu0 0.0
    %1047 = vmatpush1.msra.mxu0 0.0
    %1048 = vmatprep.subr.mxu0 0.0
    %1049 = vmatpush1.msra.mxu0 0.0
    %1050 = vmatprep.subr.mxu0 0.0
    %1051 = vmatpush1.msra.mxu0 0.0
    %1052 = vmatprep.subr.mxu0 0.0
    %1053 = vmatpush1.msra.mxu0 0.0
    %1054 = vmatprep.subr.mxu0 0.0
    %1055 = vmatpush1.msra.mxu0 0.0
    %1056 = vmatprep.subr.mxu0 0.0
    %1057 = vmatpush1.msra.mxu0 0.0
    %1058 = vmatprep.subr.mxu0 0.0
    %1059 = vmatpush1.msra.mxu0 0.0
    %1060 = vmatprep.subr.mxu0 0.0
    %1061 = vmatpush1.msra.mxu0 0.0
    %1062 = vmatprep.subr.mxu0 0.0
    %1063 = vmatpush1.msra.mxu0 0.0
    %1064 = vmatprep.subr.mxu0 0.0
    %1065 = vmatpush1.msra.mxu0 0.0
    %1066 = vmatprep.subr.mxu0 0.0
    %1067 = vmatpush1.msra.mxu0 0.0
    %1068 = vmatprep.subr.mxu0 0.0
    %1069 = vmatpush1.msra.mxu0 0.0
    %1070 = vmatprep.subr.mxu0 0.0
    %v1071 = vand.u32 %v795, 4294901760
    %v1072 = vsub.f32 %v795, %v1071
    %1073 = vmatpush1.msra.mxu0 %v1072
    %1074 = vmatprep.subr.mxu0 0.0
    %v1075 = vand.u32 %v794, 4294901760
    %v1076 = vsub.f32 %v794, %v1075
    %1077 = vmatpush1.msra.mxu0 %v1076
    %1078 = vmatprep.subr.mxu0 0.0
    %v1079 = vand.u32 %v793, 4294901760
    %v1080 = vsub.f32 %v793, %v1079
    %1081 = vmatpush1.msra.mxu0 %v1080
    %1082 = vmatprep.subr.mxu0 0.0
    %v1083 = vand.u32 %v792, 4294901760
    %v1084 = vsub.f32 %v792, %v1083
    %1085 = vmatpush1.msra.mxu0 %v1084
    %1086 = vmatprep.subr.mxu0 0.0
    %1087 = vmatpush2.msra.mxu0 0.0
    %1088 = vmatprep.subr.mxu0 0.0
    %1089 = vmatpush2.msra.mxu0 0.0
    %1090 = vmatprep.subr.mxu0 0.0
    %1091 = vmatpush2.msra.mxu0 0.0
    %1092 = vmatprep.subr.mxu0 0.0
    %1093 = vmatpush2.msra.mxu0 0.0
    %1094 = vmatprep.subr.mxu0 0.0
    %1095 = vmatpush2.msra.mxu0 0.0
    %1096 = vmatprep.subr.mxu0 0.0
    %1097 = vmatpush2.msra.mxu0 0.0
    %1098 = vmatprep.subr.mxu0 0.0
    %1099 = vmatpush2.msra.mxu0 0.0
    %1100 = vmatprep.subr.mxu0 0.0
    %1101 = vmatpush2.msra.mxu0 0.0
    %1102 = vmatprep.subr.mxu0 0.0
    %1103 = vmatpush2.msra.mxu0 0.0
    %1104 = vmatprep.subr.mxu0 0.0
    %1105 = vmatpush2.msra.mxu0 0.0
    %1106 = vmatprep.subr.mxu0 0.0
    %1107 = vmatpush2.msra.mxu0 0.0
    %1108 = vmatprep.subr.mxu0 0.0
    %1109 = vmatpush2.msra.mxu0 0.0
    %1110 = vmatprep.subr.mxu0 0.0
    %1111 = vmatpush2.msra.mxu0 0.0
    %1112 = vmatprep.subr.mxu0 0.0
    %1113 = vmatpush2.msra.mxu0 0.0
    %1114 = vmatprep.subr.mxu0 0.0
    %1115 = vmatpush2.msra.mxu0 0.0
    %1116 = vmatprep.subr.mxu0 0.0
    %1117 = vmatpush2.msra.mxu0 0.0
    %1118 = vmatprep.mubr.f32.mxu0 0.0
    %v1119 = vand.u32 %v817, 4294901760
    %v1120 = vsub.f32 %v817, %v1119
    %1121 = vmatmul.mubr.f32.gmra.mxu0 %v1120
    %v1122 = vpop.f32.mrf.mxu0
    %v1123 = vadd.f32 %v1025, %v1122
    %v1124 = vpop.f32.mrf.mxu0
    %1125 = vmatprep.mubr.f32.mxu0 0.0
    %v1126 = vand.u32 %v820, 4294901760
    %v1127 = vsub.f32 %v820, %v1126
    %1128 = vmatmul.mubr.f32.gmra.mxu0 %v1127
    %v1129 = vpop.f32.mrf.mxu0
    %v1130 = vadd.f32 %v1031, %v1129
    %v1131 = vpop.f32.mrf.mxu0
    %1132 = vmatprep.mubr.f32.mxu0 0.0
    %v1133 = vand.u32 %v823, 4294901760
    %v1134 = vsub.f32 %v823, %v1133
    %1135 = vmatmul.mubr.f32.gmra.mxu0 %v1134
    %v1136 = vpop.f32.mrf.mxu0
    %v1137 = vadd.f32 %v1037, %v1136
    %v1138 = vpop.f32.mrf.mxu0
    %1139 = vmatprep.mubr.f32.mxu0 0.0
    %v1140 = vand.u32 %v826, 4294901760
    %v1141 = vsub.f32 %v826, %v1140
    %1142 = vmatmul.mubr.f32.gmra.mxu0 %v1141
    %v1143 = vpop.f32.mrf.mxu0
    %v1144 = vadd.f32 %v1043, %v1143
    %v1145 = vpop.f32.mrf.mxu0
    %1146 = vdwg.mxu0
    %1147 = vmatprep.subr.mxu0 0.0
    %1148 = vmatpush1.msra.mxu0 0.0
    %1149 = vmatprep.subr.mxu0 0.0
    %1150 = vmatpush1.msra.mxu0 0.0
    %1151 = vmatprep.subr.mxu0 0.0
    %1152 = vmatpush1.msra.mxu0 0.0
    %1153 = vmatprep.subr.mxu0 0.0
    %1154 = vmatpush1.msra.mxu0 0.0
    %1155 = vmatprep.subr.mxu0 0.0
    %1156 = vmatpush1.msra.mxu0 0.0
    %1157 = vmatprep.subr.mxu0 0.0
    %1158 = vmatpush1.msra.mxu0 0.0
    %1159 = vmatprep.subr.mxu0 0.0
    %1160 = vmatpush1.msra.mxu0 0.0
    %1161 = vmatprep.subr.mxu0 0.0
    %1162 = vmatpush1.msra.mxu0 0.0
    %1163 = vmatprep.subr.mxu0 0.0
    %1164 = vmatpush1.msra.mxu0 0.0
    %1165 = vmatprep.subr.mxu0 0.0
    %1166 = vmatpush1.msra.mxu0 0.0
    %1167 = vmatprep.subr.mxu0 0.0
    %1168 = vmatpush1.msra.mxu0 0.0
    %1169 = vmatprep.subr.mxu0 0.0
    %1170 = vmatpush1.msra.mxu0 0.0
    %1171 = vmatprep.subr.mxu0 0.0
    %v1172 = vand.u32 %v795, 4294901760
    %1173 = vmatpush1.msra.mxu0 %v1172
    %1174 = vmatprep.subr.mxu0 0.0
    %v1175 = vand.u32 %v794, 4294901760
    %1176 = vmatpush1.msra.mxu0 %v1175
    %1177 = vmatprep.subr.mxu0 0.0
    %v1178 = vand.u32 %v793, 4294901760
    %1179 = vmatpush1.msra.mxu0 %v1178
    %1180 = vmatprep.subr.mxu0 0.0
    %v1181 = vand.u32 %v792, 4294901760
    %1182 = vmatpush1.msra.mxu0 %v1181
    %1183 = vmatprep.subr.mxu0 0.0
    %1184 = vmatpush2.msra.mxu0 0.0
    %1185 = vmatprep.subr.mxu0 0.0
    %1186 = vmatpush2.msra.mxu0 0.0
    %1187 = vmatprep.subr.mxu0 0.0
    %1188 = vmatpush2.msra.mxu0 0.0
    %1189 = vmatprep.subr.mxu0 0.0
    %1190 = vmatpush2.msra.mxu0 0.0
    %1191 = vmatprep.subr.mxu0 0.0
    %1192 = vmatpush2.msra.mxu0 0.0
    %1193 = vmatprep.subr.mxu0 0.0
    %1194 = vmatpush2.msra.mxu0 0.0
    %1195 = vmatprep.subr.mxu0 0.0
    %1196 = vmatpush2.msra.mxu0 0.0
    %1197 = vmatprep.subr.mxu0 0.0
    %1198 = vmatpush2.msra.mxu0 0.0
    %1199 = vmatprep.subr.mxu0 0.0
    %1200 = vmatpush2.msra.mxu0 0.0
    %1201 = vmatprep.subr.mxu0 0.0
    %1202 = vmatpush2.msra.mxu0 0.0
    %1203 = vmatprep.subr.mxu0 0.0
    %1204 = vmatpush2.msra.mxu0 0.0
    %1205 = vmatprep.subr.mxu0 0.0
    %1206 = vmatpush2.msra.mxu0 0.0
    %1207 = vmatprep.subr.mxu0 0.0
    %1208 = vmatpush2.msra.mxu0 0.0
    %1209 = vmatprep.subr.mxu0 0.0
    %1210 = vmatpush2.msra.mxu0 0.0
    %1211 = vmatprep.subr.mxu0 0.0
    %1212 = vmatpush2.msra.mxu0 0.0
    %1213 = vmatprep.subr.mxu0 0.0
    %1214 = vmatpush2.msra.mxu0 0.0
    %1215 = vmatprep.mubr.f32.mxu0 0.0
    %v1216 = vand.u32 %v817, 4294901760
    %v1217 = vsub.f32 %v817, %v1216
    %v1218 = vand.u32 %v1217, 4294901760
    %1219 = vmatmul.mubr.f32.gmra.mxu0 %v1218
    %v1220 = vpop.f32.mrf.mxu0
    %v1221 = vadd.f32 %v1123, %v1220
    %v1222 = vpop.f32.mrf.mxu0
    %1223 = vmatprep.mubr.f32.mxu0 0.0
    %v1224 = vand.u32 %v820, 4294901760
    %v1225 = vsub.f32 %v820, %v1224
    %v1226 = vand.u32 %v1225, 4294901760
    %1227 = vmatmul.mubr.f32.gmra.mxu0 %v1226
    %v1228 = vpop.f32.mrf.mxu0
    %v1229 = vadd.f32 %v1130, %v1228
    %v1230 = vpop.f32.mrf.mxu0
    %1231 = vmatprep.mubr.f32.mxu0 0.0
    %v1232 = vand.u32 %v823, 4294901760
    %v1233 = vsub.f32 %v823, %v1232
    %v1234 = vand.u32 %v1233, 4294901760
    %1235 = vmatmul.mubr.f32.gmra.mxu0 %v1234
    %v1236 = vpop.f32.mrf.mxu0
    %v1237 = vadd.f32 %v1137, %v1236
    %v1238 = vpop.f32.mrf.mxu0
    %1239 = vmatprep.mubr.f32.mxu0 0.0
    %v1240 = vand.u32 %v826, 4294901760
    %v1241 = vsub.f32 %v826, %v1240
    %v1242 = vand.u32 %v1241, 4294901760
    %1243 = vmatmul.mubr.f32.gmra.mxu0 %v1242
    %v1244 = vpop.f32.mrf.mxu0
    %v1245 = vadd.f32 %v1144, %v1244
    %v1246 = vpop.f32.mrf.mxu0
    %1247 = vdwg.mxu0
    %1248 = vmatprep.subr.mxu0 0.0
    %1249 = vmatpush1.msra.mxu0 0.0
    %1250 = vmatprep.subr.mxu0 0.0
    %1251 = vmatpush1.msra.mxu0 0.0
    %1252 = vmatprep.subr.mxu0 0.0
    %1253 = vmatpush1.msra.mxu0 0.0
    %1254 = vmatprep.subr.mxu0 0.0
    %1255 = vmatpush1.msra.mxu0 0.0
    %1256 = vmatprep.subr.mxu0 0.0
    %1257 = vmatpush1.msra.mxu0 0.0
    %1258 = vmatprep.subr.mxu0 0.0
    %1259 = vmatpush1.msra.mxu0 0.0
    %1260 = vmatprep.subr.mxu0 0.0
    %1261 = vmatpush1.msra.mxu0 0.0
    %1262 = vmatprep.subr.mxu0 0.0
    %1263 = vmatpush1.msra.mxu0 0.0
    %1264 = vmatprep.subr.mxu0 0.0
    %1265 = vmatpush1.msra.mxu0 0.0
    %1266 = vmatprep.subr.mxu0 0.0
    %1267 = vmatpush1.msra.mxu0 0.0
    %1268 = vmatprep.subr.mxu0 0.0
    %1269 = vmatpush1.msra.mxu0 0.0
    %1270 = vmatprep.subr.mxu0 0.0
    %1271 = vmatpush1.msra.mxu0 0.0
    %1272 = vmatprep.subr.mxu0 0.0
    %v1273 = vand.u32 %v795, 4294901760
    %v1274 = vsub.f32 %v795, %v1273
    %v1275 = vand.u32 %v1274, 4294901760
    %1276 = vmatpush1.msra.mxu0 %v1275
    %1277 = vmatprep.subr.mxu0 0.0
    %v1278 = vand.u32 %v794, 4294901760
    %v1279 = vsub.f32 %v794, %v1278
    %v1280 = vand.u32 %v1279, 4294901760
    %1281 = vmatpush1.msra.mxu0 %v1280
    %1282 = vmatprep.subr.mxu0 0.0
    %v1283 = vand.u32 %v793, 4294901760
    %v1284 = vsub.f32 %v793, %v1283
    %v1285 = vand.u32 %v1284, 4294901760
    %1286 = vmatpush1.msra.mxu0 %v1285
    %1287 = vmatprep.subr.mxu0 0.0
    %v1288 = vand.u32 %v792, 4294901760
    %v1289 = vsub.f32 %v792, %v1288
    %v1290 = vand.u32 %v1289, 4294901760
    %1291 = vmatpush1.msra.mxu0 %v1290
    %1292 = vmatprep.subr.mxu0 0.0
    %1293 = vmatpush2.msra.mxu0 0.0
    %1294 = vmatprep.subr.mxu0 0.0
    %1295 = vmatpush2.msra.mxu0 0.0
    %1296 = vmatprep.subr.mxu0 0.0
    %1297 = vmatpush2.msra.mxu0 0.0
    %1298 = vmatprep.subr.mxu0 0.0
    %1299 = vmatpush2.msra.mxu0 0.0
    %1300 = vmatprep.subr.mxu0 0.0
    %1301 = vmatpush2.msra.mxu0 0.0
    %1302 = vmatprep.subr.mxu0 0.0
    %1303 = vmatpush2.msra.mxu0 0.0
    %1304 = vmatprep.subr.mxu0 0.0
    %1305 = vmatpush2.msra.mxu0 0.0
    %1306 = vmatprep.subr.mxu0 0.0
    %1307 = vmatpush2.msra.mxu0 0.0
    %1308 = vmatprep.subr.mxu0 0.0
    %1309 = vmatpush2.msra.mxu0 0.0
    %1310 = vmatprep.subr.mxu0 0.0
    %1311 = vmatpush2.msra.mxu0 0.0
    %1312 = vmatprep.subr.mxu0 0.0
    %1313 = vmatpush2.msra.mxu0 0.0
    %1314 = vmatprep.subr.mxu0 0.0
    %1315 = vmatpush2.msra.mxu0 0.0
    %1316 = vmatprep.subr.mxu0 0.0
    %1317 = vmatpush2.msra.mxu0 0.0
    %1318 = vmatprep.subr.mxu0 0.0
    %1319 = vmatpush2.msra.mxu0 0.0
    %1320 = vmatprep.subr.mxu0 0.0
    %1321 = vmatpush2.msra.mxu0 0.0
    %1322 = vmatprep.subr.mxu0 0.0
    %1323 = vmatpush2.msra.mxu0 0.0
    %1324 = vmatprep.mubr.f32.mxu0 0.0
    %v1325 = vand.u32 %v817, 4294901760
    %1326 = vmatmul.mubr.f32.gmra.mxu0 %v1325
    %v1327 = vpop.f32.mrf.mxu0
    %v1328 = vadd.f32 %v1221, %v1327
    %v1329 = vpop.f32.mrf.mxu0
    %1330 = vmatprep.mubr.f32.mxu0 0.0
    %v1331 = vand.u32 %v820, 4294901760
    %1332 = vmatmul.mubr.f32.gmra.mxu0 %v1331
    %v1333 = vpop.f32.mrf.mxu0
    %v1334 = vadd.f32 %v1229, %v1333
    %v1335 = vpop.f32.mrf.mxu0
    %1336 = vmatprep.mubr.f32.mxu0 0.0
    %v1337 = vand.u32 %v823, 4294901760
    %1338 = vmatmul.mubr.f32.gmra.mxu0 %v1337
    %v1339 = vpop.f32.mrf.mxu0
    %v1340 = vadd.f32 %v1237, %v1339
    %v1341 = vpop.f32.mrf.mxu0
    %1342 = vmatprep.mubr.f32.mxu0 0.0
    %v1343 = vand.u32 %v826, 4294901760
    %1344 = vmatmul.mubr.f32.gmra.mxu0 %v1343
    %v1345 = vpop.f32.mrf.mxu0
    %v1346 = vadd.f32 %v1245, %v1345
    %v1347 = vpop.f32.mrf.mxu0
    %1348 = vdwg.mxu0
    %1349 = vmatprep.subr.mxu0 0.0
    %1350 = vmatpush1.msra.mxu0 0.0
    %1351 = vmatprep.subr.mxu0 0.0
    %1352 = vmatpush1.msra.mxu0 0.0
    %1353 = vmatprep.subr.mxu0 0.0
    %1354 = vmatpush1.msra.mxu0 0.0
    %1355 = vmatprep.subr.mxu0 0.0
    %1356 = vmatpush1.msra.mxu0 0.0
    %1357 = vmatprep.subr.mxu0 0.0
    %1358 = vmatpush1.msra.mxu0 0.0
    %1359 = vmatprep.subr.mxu0 0.0
    %1360 = vmatpush1.msra.mxu0 0.0
    %1361 = vmatprep.subr.mxu0 0.0
    %1362 = vmatpush1.msra.mxu0 0.0
    %1363 = vmatprep.subr.mxu0 0.0
    %1364 = vmatpush1.msra.mxu0 0.0
    %1365 = vmatprep.subr.mxu0 0.0
    %1366 = vmatpush1.msra.mxu0 0.0
    %1367 = vmatprep.subr.mxu0 0.0
    %1368 = vmatpush1.msra.mxu0 0.0
    %1369 = vmatprep.subr.mxu0 0.0
    %1370 = vmatpush1.msra.mxu0 0.0
    %1371 = vmatprep.subr.mxu0 0.0
    %1372 = vmatpush1.msra.mxu0 0.0
    %1373 = vmatprep.subr.mxu0 0.0
    %v1374 = vand.u32 %v795, 4294901760
    %1375 = vmatpush1.msra.mxu0 %v1374
    %1376 = vmatprep.subr.mxu0 0.0
    %v1377 = vand.u32 %v794, 4294901760
    %1378 = vmatpush1.msra.mxu0 %v1377
    %1379 = vmatprep.subr.mxu0 0.0
    %v1380 = vand.u32 %v793, 4294901760
    %1381 = vmatpush1.msra.mxu0 %v1380
    %1382 = vmatprep.subr.mxu0 0.0
    %v1383 = vand.u32 %v792, 4294901760
    %1384 = vmatpush1.msra.mxu0 %v1383
    %1385 = vmatprep.subr.mxu0 0.0
    %1386 = vmatpush2.msra.mxu0 0.0
    %1387 = vmatprep.subr.mxu0 0.0
    %1388 = vmatpush2.msra.mxu0 0.0
    %1389 = vmatprep.subr.mxu0 0.0
    %1390 = vmatpush2.msra.mxu0 0.0
    %1391 = vmatprep.subr.mxu0 0.0
    %1392 = vmatpush2.msra.mxu0 0.0
    %1393 = vmatprep.subr.mxu0 0.0
    %1394 = vmatpush2.msra.mxu0 0.0
    %1395 = vmatprep.subr.mxu0 0.0
    %1396 = vmatpush2.msra.mxu0 0.0
    %1397 = vmatprep.subr.mxu0 0.0
    %1398 = vmatpush2.msra.mxu0 0.0
    %1399 = vmatprep.subr.mxu0 0.0
    %1400 = vmatpush2.msra.mxu0 0.0
    %1401 = vmatprep.subr.mxu0 0.0
    %1402 = vmatpush2.msra.mxu0 0.0
    %1403 = vmatprep.subr.mxu0 0.0
    %1404 = vmatpush2.msra.mxu0 0.0
    %1405 = vmatprep.subr.mxu0 0.0
    %1406 = vmatpush2.msra.mxu0 0.0
    %1407 = vmatprep.subr.mxu0 0.0
    %1408 = vmatpush2.msra.mxu0 0.0
    %1409 = vmatprep.subr.mxu0 0.0
    %1410 = vmatpush2.msra.mxu0 0.0
    %1411 = vmatprep.subr.mxu0 0.0
    %1412 = vmatpush2.msra.mxu0 0.0
    %1413 = vmatprep.subr.mxu0 0.0
    %1414 = vmatpush2.msra.mxu0 0.0
    %1415 = vmatprep.subr.mxu0 0.0
    %1416 = vmatpush2.msra.mxu0 0.0
    %1417 = vmatprep.mubr.f32.mxu0 0.0
    %v1418 = vand.u32 %v817, 4294901760
    %1419 = vmatmul.mubr.f32.gmra.mxu0 %v1418
    %v1420 = vpop.f32.mrf.mxu0
    %v1421 = vadd.f32 %v1328, %v1420
    %v1422 = vpop.f32.mrf.mxu0
    %1423 = vmatprep.mubr.f32.mxu0 0.0
    %v1424 = vand.u32 %v820, 4294901760
    %1425 = vmatmul.mubr.f32.gmra.mxu0 %v1424
    %v1426 = vpop.f32.mrf.mxu0
    %v1427 = vadd.f32 %v1334, %v1426
    %v1428 = vpop.f32.mrf.mxu0
    %1429 = vmatprep.mubr.f32.mxu0 0.0
    %v1430 = vand.u32 %v823, 4294901760
    %1431 = vmatmul.mubr.f32.gmra.mxu0 %v1430
    %v1432 = vpop.f32.mrf.mxu0
    %v1433 = vadd.f32 %v1340, %v1432
    %v1434 = vpop.f32.mrf.mxu0
    %1435 = vmatprep.mubr.f32.mxu0 0.0
    %v1436 = vand.u32 %v826, 4294901760
    %1437 = vmatmul.mubr.f32.gmra.mxu0 %v1436
    %v1438 = vpop.f32.mrf.mxu0
    %v1439 = vadd.f32 %v1346, %v1438
    %v1440 = vpop.f32.mrf.mxu0
    %1441 = vdwg.mxu0
    %v1442 = vtanh.pop %v1421
    %v1443 = vtanh.pop %v1427
    %v1444 = vtanh.pop %v1433
    %v1445 = vtanh.pop %v1439
    %v1446 = vld [vmem:[%s4] sm:$0xff]
    %v1447 = vld [vmem:[%s4 + $0x8] sm:$0xff]
    %v1448 = vld [vmem:[%s4 + $0x10] sm:$0xff]
    %v1449 = vld [vmem:[%s4 + $0x18] sm:$0xff]
    %1451 = vset.pattern.permute.xlu0 0
    %1452 = vperm.xlu0 %1451, %v1446
    %v1453 = vpop.permute.xlu0 %1452
    %1456 = vset.pattern.permute.xlu0 0
    %1457 = vperm.xlu0 %1456, %v1447
    %v1458 = vpop.permute.xlu0 %1457
    %1461 = vset.pattern.permute.xlu0 0
    %1462 = vperm.xlu0 %1461, %v1448
    %v1463 = vpop.permute.xlu0 %1462
    %1466 = vset.pattern.permute.xlu0 0
    %1467 = vperm.xlu0 %1466, %v1449
    %v1468 = vpop.permute.xlu0 %1467
    %v1470 = vmul.f32 %v1453, %v1442
    %v1471 = vmul.f32 %v1458, %v1443
    %v1472 = vmul.f32 %v1463, %v1444
    %v1473 = vmul.f32 %v1468, %v1445
    %v1474 = vadd.f32 %v1470, %v1471
    %v1475 = vadd.f32 %v1474, %v1472
    %v1476 = vadd.f32 %v1475, %v1473
    %v1477 = vrot.slane %v1476, 4
    %v1478 = vadd.f32 %v1476, %v1477
    %v1479 = vrot.slane %v1478, 2
    %v1480 = vadd.f32 %v1478, %v1479
    %v1481 = vrot.slane %v1480, 1
    %v1482 = vadd.f32 %v1480, %v1481
    %v1483 = vld [vmem:[%s5] sm:$0x1]
    %1485 = vset.pattern.permute.xlu0 3
    %1486 = vperm.xlu0 %1485, %v1483
    %v1487 = vpop.permute.xlu0 %1486
    %v1489 = vadd.f32 %v1482, %v1487
    %1490 = vst [vmem:[#allocation2] sm:$0x1] %v1489
    // Predicated region
    $region26: #{tpu_custom_call.1} parent=1 // pred_check
      _
    $region27: #{tpu_custom_call.1} parent=1 // pred_check_branch
      %1492 = sbr.rel (0) target = $region29
    $region28: #{tpu_custom_call.1} parent=1 // pred_region
      %s1494 = ssub.s32 16, 16
      %1495 = vsyncadd [#allocation3], %s1494
      %s1497 = sshll.u32 [#allocation2], 4
      %s1498 = int_to_ptr.vmem [resolvable:$true] %s1497
      %1500 = dma.vmem_to_hbm [thread:$0]  %s1498, 16, %s6, [#allocation3]
    $region29: #{tpu_custom_call.1} parent=1 // pred_fallthru
      _
    // Predicated region
    $region30: #{tpu_custom_call.1} parent=1 // pred_check
      _
    $region31: #{tpu_custom_call.1} parent=1 // pred_check_branch
      %1502 = sbr.rel (0) target = $region33
    $region32: #{tpu_custom_call.1} parent=1 // pred_region
      %1503 = dma.done [#allocation3], 16
    $region33: #{tpu_custom_call.1} parent=1 // pred_fallthru
      _
    %1504 = vsyncpa [#allocation3], 1

</llo_original>
